<compile_context>
chip_gen: v6e
topology: v6e:2x2x1
jax: 0.10.0
libtpu: 0.0.40
codegen_flags: <defaults>
</compile_context>

<pallas_src>
import functools

import jax
import jax.numpy as jnp
from jax.experimental import pallas as pl
from jax.experimental.pallas import tpu as pltpu

EMB_DIM = 256    # GeCo forces self.emb_dim = 256 regardless of ctor arg
PAD_LANES = 128  # lane-dense padding width for fused class column / output


def _round_up(x, m):
    return ((x + m - 1) // m) * m


def _choose_tile(n, cap=2048):
    """Row tile: big (amortize per-step overhead), but keep >=2 grid steps for
    v7x's two TensorCores when N allows; single tile for tiny inputs."""
    n128 = _round_up(max(n, 1), 128)
    if n128 <= 256:
        return n128
    half = _round_up((n128 + 1) // 2, 128)
    return min(cap, half)


# --------------------------------------------------------------------------
# Pallas kernel: fused class_embed + bbox_embed heads over all HW positions
#   class_embed : Linear(256 -> 1) + LeakyReLU(0.01)  (fused into layer-1 matmul)
#   bbox_embed  : MLP 256 -> 256 -> 256 -> 4, ReLU hidden, sigmoid (forward)
# Output: one lane-dense (tile_n, 128) bf16 slab:
#   lane 0      = centerness
#   lanes 1..4  = sigmoid(bbox)
# --------------------------------------------------------------------------
def _heads_kernel(x_ref, w1c_ref, b1c_ref, w2_ref, b2_ref, w3p_ref, b3p_ref,
                  out_ref):
    x = x_ref[...]                                            # (TN, 256) bf16

    # layer 1 (bbox hidden) + class head fused: w1c is (256, 256+128)
    hc = jnp.dot(x, w1c_ref[...],
                 preferred_element_type=jnp.float32) + b1c_ref[...]
    h = jnp.maximum(hc[:, :EMB_DIM], 0.0).astype(jnp.bfloat16)   # ReLU hidden

    cent = hc[:, EMB_DIM:]                                    # (TN, 128), lane 0 valid
    cent = jnp.where(cent >= 0.0, cent, 0.01 * cent)          # LeakyReLU(0.01), f32
    # Stash the class slab now so its vregs are not live across matmuls 2/3.
    out_ref[...] = cent.astype(out_ref.dtype)

    # layer 2
    h2 = jnp.maximum(
        jnp.dot(h, w2_ref[...],
                preferred_element_type=jnp.float32) + b2_ref[...], 0.0
    ).astype(jnp.bfloat16)

    # layer 3 (4 real output cols padded to 128 lanes: cols 1..4)
    o = jnp.dot(h2, w3p_ref[...],
                preferred_element_type=jnp.float32) + b3p_ref[...]
    box = jax.nn.sigmoid(o)                                   # f32; .sigmoid() in forward

    lane = jax.lax.broadcasted_iota(jnp.int32, box.shape, 1)
    out_ref[...] = jnp.where(lane == 0, out_ref[...], box.astype(out_ref.dtype))


def geco_heads(x_flat, params, *, tile_cap=2048):
    """x_flat: (N, 256) bf16/f32 -> (centerness (N,1), boxes (N,4)) in bf16."""
    N, C = x_flat.shape
    assert C == EMB_DIM, (N, C)

    # --- fuse / pad weights (cheap, small tensors) ---------------------------
    wc = params["wc"].astype(jnp.float32)                     # (256, 1)
    bc = params["bc"].astype(jnp.float32)                     # (1, 1)
    wc_pad = jnp.zeros((C, PAD_LANES), jnp.float32).at[:, :1].set(wc)
    bc_pad = jnp.zeros((1, PAD_LANES), jnp.float32).at[:, :1].set(bc)
    w1c = jnp.concatenate(
        [params["w1"].astype(jnp.float32), wc_pad], axis=1).astype(jnp.bfloat16)
    b1c = jnp.concatenate(
        [params["b1"].astype(jnp.float32), bc_pad], axis=1)   # f32 bias

    w2 = params["w2"].astype(jnp.bfloat16)
    b2 = params["b2"].astype(jnp.float32)

    w3p = jnp.zeros((C, PAD_LANES), jnp.float32).at[:, 1:5].set(
        params["w3"].astype(jnp.float32)).astype(jnp.bfloat16)
    b3p = jnp.zeros((1, PAD_LANES), jnp.float32).at[:, 1:5].set(
        params["b3"].astype(jnp.float32))

    # --- tile N (no explicit padding; Pallas handles the ragged last block) --
    tile_n = _choose_tile(N, tile_cap)
    x_bf = x_flat.astype(jnp.bfloat16)        # no-op when src already bf16

    wide = C + PAD_LANES
    out = pl.pallas_call(
        _heads_kernel,
        grid=(pl.cdiv(N, tile_n),),
        in_specs=[
            pl.BlockSpec((tile_n, C), lambda i: (i, 0)),       # x (streamed)
            pl.BlockSpec((C, wide), lambda i: (0, 0)),         # w1c (resident)
            pl.BlockSpec((1, wide), lambda i: (0, 0)),         # b1c
            pl.BlockSpec((C, C), lambda i: (0, 0)),            # w2
            pl.BlockSpec((1, C), lambda i: (0, 0)),            # b2
            pl.BlockSpec((C, PAD_LANES), lambda i: (0, 0)),    # w3 (padded)
            pl.BlockSpec((1, PAD_LANES), lambda i: (0, 0)),    # b3 (padded)
        ],
        out_specs=pl.BlockSpec((tile_n, PAD_LANES), lambda i: (i, 0)),
        out_shape=jax.ShapeDtypeStruct((N, PAD_LANES), jnp.bfloat16),
        compiler_params=pltpu.CompilerParams(
            dimension_semantics=("parallel",),
            vmem_limit_bytes=64 * 1024 * 1024),
    )(x_bf, w1c, b1c, w2, b2, w3p, b3p)

    cent = out[:, 0:1]
    box = out[:, 1:5]
    return cent, box


# --------------------------------------------------------------------------
# shape_or_objectness MLP: Linear(2,64)->ReLU->Linear(64,256)->ReLU
#                          ->Linear(256, 1**2 * 256)
# Runs in plain jnp: only a handful of rows, no benefit from a kernel launch.
# --------------------------------------------------------------------------
def shape_mlp(box_hw, params):
    h = jax.nn.relu(box_hw.astype(jnp.float32) @ params["sw1"] + params["sb1"])
    h = jax.nn.relu(h @ params["sw2"] + params["sb2"])
    return h @ params["sw3"] + params["sb3"]


# --------------------------------------------------------------------------
# create_prototypes glue: 1x1 roi_align (aligned=True) + shape MLP
# --------------------------------------------------------------------------
def roi_align_1x1(feat, bboxes, spatial_scale):
    # feat: (bs, Hf, Wf, C) channels-last (bf16 ok; math in f32).
    # TODO(synk): torchvision roi_align's adaptive sampling_ratio (-1) is data
    # dependent; approximated here by a single bilinear sample at the ROI center.
    bs, Hf, Wf, C = feat.shape
    x1 = bboxes[..., 0] * spatial_scale - 0.5
    y1 = bboxes[..., 1] * spatial_scale - 0.5
    x2 = bboxes[..., 2] * spatial_scale - 0.5
    y2 = bboxes[..., 3] * spatial_scale - 0.5
    cx = 0.5 * (x1 + x2)
    cy = 0.5 * (y1 + y2)
    x0 = jnp.floor(cx)
    y0 = jnp.floor(cy)
    lx = cx - x0
    ly = cy - y0
    x0i = jnp.clip(x0, 0, Wf - 1).astype(jnp.int32)
    x1i = jnp.clip(x0 + 1, 0, Wf - 1).astype(jnp.int32)
    y0i = jnp.clip(y0, 0, Hf - 1).astype(jnp.int32)
    y1i = jnp.clip(y0 + 1, 0, Hf - 1).astype(jnp.int32)
    bidx = jnp.arange(bs)[:, None]
    v00 = feat[bidx, y0i, x0i].astype(jnp.float32)
    v01 = feat[bidx, y0i, x1i].astype(jnp.float32)
    v10 = feat[bidx, y1i, x0i].astype(jnp.float32)
    v11 = feat[bidx, y1i, x1i].astype(jnp.float32)
    w00 = ((1 - ly) * (1 - lx))[..., None]
    w01 = ((1 - ly) * lx)[..., None]
    w10 = (ly * (1 - lx))[..., None]
    w11 = (ly * lx)[..., None]
    return v00 * w00 + v01 * w01 + v10 * w10 + v11 * w11     # (bs, K, C) f32


def create_prototypes(src, bboxes, params, *, reduction):
    bs = src.shape[0]
    exemplars = roi_align_1x1(src, bboxes, spatial_scale=1.0 / reduction)
    box_hw = jnp.stack(
        [bboxes[..., 2] - bboxes[..., 0], bboxes[..., 3] - bboxes[..., 1]],
        axis=-1)
    shape_emb = shape_mlp(box_hw.reshape(-1, 2), params).reshape(bs, -1, EMB_DIM)
    return jnp.concatenate([exemplars, shape_emb], axis=1)


# --------------------------------------------------------------------------
# GeCo forward (inference head path)
# --------------------------------------------------------------------------
@functools.partial(jax.jit, static_argnames=("reduction",))
def geco_forward(img, bboxes, params, *, reduction=8):
    bs, cin, H, W = img.shape

    # TODO(synk): real Backbone (pretrained ViT/HQ features) is an external
    # module; substituted by a deterministic patch-embed projection to 256 ch.
    # Emitted in bf16 so the heads kernel streams bf16 with no extra cast pass.
    Hf, Wf = H // reduction, W // reduction
    patches = img.reshape(bs, cin, Hf, reduction, Wf, reduction)
    patches = patches.transpose(0, 2, 4, 1, 3, 5).reshape(
        bs, Hf, Wf, cin * reduction * reduction)
    src = (jnp.einsum("bhwp,pc->bhwc",
                      patches.astype(jnp.bfloat16),
                      params["patch_w"].astype(jnp.bfloat16),
                      preferred_element_type=jnp.float32)
           + params["patch_b"]).astype(jnp.bfloat16)
    # src stays NHWC: (bs, Hf, Wf, 256) bf16

    prototype_embeddings = create_prototypes(src, bboxes, params,
                                             reduction=reduction)

    # TODO(synk): DQE adapt_features + PromptEncoder_DQE dense PE are external
    # checkpoint-backed modules; identity passthrough of the backbone features.
    adapted_f = src                                          # (bs, Hf, Wf, 256)

    x_flat = adapted_f.reshape(bs * Hf * Wf, EMB_DIM)        # bf16, contiguous
    cent_flat, box_flat = geco_heads(x_flat, params)

    # module boundary keeps PyTorch NCHW / f32 for the small per-pixel maps
    centerness = cent_flat.reshape(bs, Hf, Wf, 1).transpose(0, 3, 1, 2)
    centerness = centerness.astype(jnp.float32)
    outputs_coord = box_flat.reshape(bs, Hf, Wf, 4).transpose(0, 3, 1, 2)
    outputs_coord = outputs_coord.astype(jnp.float32)

    # TODO(synk): boxes_with_scores + SAM prompt_encoder/mask_decoder based
    # refine_bounding_boxes require the pretrained SAM checkpoint and
    # dynamic-shape mask->bbox extraction; not reproduced here.
    return centerness, outputs_coord, prototype_embeddings


# --------------------------------------------------------------------------
# Deterministic parameter initialization (synthetic, no checkpoint load)
# --------------------------------------------------------------------------
def init_params(key, *, reduction, cin=3):
    ks = jax.random.split(key, 16)
    n = lambda k, shp, s=0.02: (s * jax.random.normal(k, shp)).astype(jnp.float32)
    return {
        # backbone proxy (patch embed)
        "patch_w": n(ks[0], (cin * reduction * reduction, EMB_DIM)),
        "patch_b": n(ks[1], (EMB_DIM,)),
        # class_embed
        "wc": n(ks[2], (EMB_DIM, 1)), "bc": n(ks[3], (1, 1)),
        # bbox_embed MLP
        "w1": n(ks[4], (EMB_DIM, EMB_DIM)), "b1": n(ks[5], (1, EMB_DIM)),
        "w2": n(ks[6], (EMB_DIM, EMB_DIM)), "b2": n(ks[7], (1, EMB_DIM)),
        "w3": n(ks[8], (EMB_DIM, 4)),       "b3": n(ks[9], (1, 4)),
        # shape_or_objectness MLP
        "sw1": n(ks[10], (2, 64)),            "sb1": n(ks[11], (1, 64)),
        "sw2": n(ks[12], (64, EMB_DIM)),      "sb2": n(ks[13], (1, EMB_DIM)),
        "sw3": n(ks[14], (EMB_DIM, EMB_DIM)), "sb3": n(ks[15], (1, EMB_DIM)),
    }


if __name__ == "__main__":
    key = jax.random.PRNGKey(0)
    k_img, k_box, k_par = jax.random.split(key, 3)

    bs, cin, image_size, reduction, num_objects = 2, 3, 64, 8, 3
    img = jax.random.normal(k_img, (bs, cin, image_size, image_size), jnp.float32)

    raw = jax.random.uniform(k_box, (bs, num_objects, 2, 2),
                             minval=4.0, maxval=float(image_size - 4))
    lo = jnp.min(raw, axis=2)
    hi = jnp.max(raw, axis=2)
    bboxes = jnp.stack([lo[..., 0], lo[..., 1], hi[..., 0], hi[..., 1]], axis=-1)

    params = init_params(k_par, reduction=reduction, cin=cin)

    centerness, outputs_coord, prototypes = geco_forward(
        img, bboxes, params, reduction=reduction)
    jax.block_until_ready((centerness, outputs_coord, prototypes))

    Hf = Wf = image_size // reduction
    assert centerness.shape == (bs, 1, Hf, Wf)
    assert outputs_coord.shape == (bs, 4, Hf, Wf)
    assert prototypes.shape == (bs, 2 * num_objects, EMB_DIM)
    assert bool(jnp.all(jnp.isfinite(centerness)))
    assert bool(jnp.all((outputs_coord >= 0.0) & (outputs_coord <= 1.0)))
    print("KERNEL_OK")
</pallas_src>

<mosaic_0001>
module attributes {stable_mosaic.version = 11 : i64} {
  func.func @_heads_kernel(%arg0: i32, %arg1: memref<128x256xbf16, #tpu.memory_space<vmem>>, %arg2: memref<256x384xbf16, #tpu.memory_space<vmem>>, %arg3: memref<1x384xf32, #tpu.memory_space<vmem>>, %arg4: memref<256x256xbf16, #tpu.memory_space<vmem>>, %arg5: memref<1x256xf32, #tpu.memory_space<vmem>>, %arg6: memref<256x128xbf16, #tpu.memory_space<vmem>>, %arg7: memref<1x128xf32, #tpu.memory_space<vmem>>, %arg8: memref<128x128xbf16, #tpu.memory_space<vmem>>) attributes {dimension_semantics = [#tpu.dimension_semantics<parallel>], iteration_bounds = array<i64: 1>, scalar_prefetch = 0 : i64, scratch_operands = 0 : i64, tpu.core_type = #tpu.core_type<tc>, window_params = [{transform_indices = @transform_0, window_bounds = array<i64: 128, 256>}, {pipeline_mode = #tpu.pipeline_mode<synchronous>, transform_indices = @transform_1, window_bounds = array<i64: 256, 384>}, {pipeline_mode = #tpu.pipeline_mode<synchronous>, transform_indices = @transform_2, window_bounds = array<i64: 1, 384>}, {pipeline_mode = #tpu.pipeline_mode<synchronous>, transform_indices = @transform_3, window_bounds = array<i64: 256, 256>}, {pipeline_mode = #tpu.pipeline_mode<synchronous>, transform_indices = @transform_4, window_bounds = array<i64: 1, 256>}, {pipeline_mode = #tpu.pipeline_mode<synchronous>, transform_indices = @transform_5, window_bounds = array<i64: 256, 128>}, {pipeline_mode = #tpu.pipeline_mode<synchronous>, transform_indices = @transform_6, window_bounds = array<i64: 1, 128>}, {transform_indices = @transform_7, window_bounds = array<i64: 128, 128>}]} {
    %c0 = arith.constant 0 : index
    %c0_0 = arith.constant 0 : index
    %0 = vector.load %arg1[%c0, %c0_0] : memref<128x256xbf16, #tpu.memory_space<vmem>>, vector<128x256xbf16>
    %c0_1 = arith.constant 0 : index
    %c0_2 = arith.constant 0 : index
    %1 = vector.load %arg2[%c0_1, %c0_2] : memref<256x384xbf16, #tpu.memory_space<vmem>>, vector<256x384xbf16>
    %cst = arith.constant dense<0.000000e+00> : vector<128x384xf32>
    %2 = tpu.matmul %0, %1, %cst {dimension_numbers = #tpu.dot_dimension_numbers<[1], [0], [0], [1], [0, 0, 1, 1], [], []>} : vector<128x256xbf16>, vector<256x384xbf16>, vector<128x384xf32> -> vector<128x384xf32>
    %c0_3 = arith.constant 0 : index
    %c0_4 = arith.constant 0 : index
    %3 = vector.load %arg3[%c0_3, %c0_4] : memref<1x384xf32, #tpu.memory_space<vmem>>, vector<1x384xf32>
    %4 = vector.broadcast %3 : vector<1x384xf32> to vector<128x384xf32>
    %5 = arith.addf %2, %4 : vector<128x384xf32>
    %6 = vector.extract_strided_slice %5 {offsets = [0, 0], sizes = [128, 256], strides = [1, 1]} : vector<128x384xf32> to vector<128x256xf32>
    %cst_5 = arith.constant 0.000000e+00 : f32
    %7 = vector.broadcast %cst_5 : f32 to vector<128x256xf32>
    %8 = arith.maximumf %6, %7 : vector<128x256xf32>
    %9 = arith.truncf %8 : vector<128x256xf32> to vector<128x256xbf16>
    %10 = vector.extract_strided_slice %5 {offsets = [0, 256], sizes = [128, 128], strides = [1, 1]} : vector<128x384xf32> to vector<128x128xf32>
    %cst_6 = arith.constant 0.000000e+00 : f32
    %11 = vector.broadcast %cst_6 : f32 to vector<128x128xf32>
    %12 = arith.cmpf oge, %10, %11 : vector<128x128xf32>
    %cst_7 = arith.constant 0.00999999977 : f32
    %13 = vector.broadcast %cst_7 : f32 to vector<128x128xf32>
    %14 = arith.mulf %13, %10 : vector<128x128xf32>
    %15 = arith.select %12, %10, %14 : vector<128x128xi1>, vector<128x128xf32>
    %16 = arith.truncf %15 : vector<128x128xf32> to vector<128x128xbf16>
    %c0_8 = arith.constant 0 : index
    %c0_9 = arith.constant 0 : index
    %17 = vector.load %arg8[%c0_8, %c0_9] : memref<128x128xbf16, #tpu.memory_space<vmem>>, vector<128x128xbf16>
    tpu.vector_store %arg8[%c0_8, %c0_9], %16 {strides = array<i32>} : memref<128x128xbf16, #tpu.memory_space<vmem>>, vector<128x128xbf16>,
    %c0_10 = arith.constant 0 : index
    %c0_11 = arith.constant 0 : index
    %18 = vector.load %arg4[%c0_10, %c0_11] : memref<256x256xbf16, #tpu.memory_space<vmem>>, vector<256x256xbf16>
    %cst_12 = arith.constant dense<0.000000e+00> : vector<128x256xf32>
    %19 = tpu.matmul %9, %18, %cst_12 {dimension_numbers = #tpu.dot_dimension_numbers<[1], [0], [0], [1], [0, 0, 1, 1], [], []>} : vector<128x256xbf16>, vector<256x256xbf16>, vector<128x256xf32> -> vector<128x256xf32>
    %c0_13 = arith.constant 0 : index
    %c0_14 = arith.constant 0 : index
    %20 = vector.load %arg5[%c0_13, %c0_14] : memref<1x256xf32, #tpu.memory_space<vmem>>, vector<1x256xf32>
    %21 = vector.broadcast %20 : vector<1x256xf32> to vector<128x256xf32>
    %22 = arith.addf %19, %21 : vector<128x256xf32>
    %cst_15 = arith.constant 0.000000e+00 : f32
    %23 = vector.broadcast %cst_15 : f32 to vector<128x256xf32>
    %24 = arith.maximumf %22, %23 : vector<128x256xf32>
    %25 = arith.truncf %24 : vector<128x256xf32> to vector<128x256xbf16>
    %c0_16 = arith.constant 0 : index
    %c0_17 = arith.constant 0 : index
    %26 = vector.load %arg6[%c0_16, %c0_17] : memref<256x128xbf16, #tpu.memory_space<vmem>>, vector<256x128xbf16>
    %cst_18 = arith.constant dense<0.000000e+00> : vector<128x128xf32>
    %27 = tpu.matmul %25, %26, %cst_18 {dimension_numbers = #tpu.dot_dimension_numbers<[1], [0], [0], [1], [0, 0, 1, 1], [], []>} : vector<128x256xbf16>, vector<256x128xbf16>, vector<128x128xf32> -> vector<128x128xf32>
    %c0_19 = arith.constant 0 : index
    %c0_20 = arith.constant 0 : index
    %28 = vector.load %arg7[%c0_19, %c0_20] : memref<1x128xf32, #tpu.memory_space<vmem>>, vector<1x128xf32>
    %29 = vector.broadcast %28 : vector<1x128xf32> to vector<128x128xf32>
    %30 = arith.addf %27, %29 : vector<128x128xf32>
    %31 = arith.negf %30 : vector<128x128xf32>
    %32 = math.exp %31 : vector<128x128xf32>
    %cst_21 = arith.constant 1.000000e+00 : f32
    %33 = vector.broadcast %cst_21 : f32 to vector<128x128xf32>
    %34 = arith.addf %33, %32 : vector<128x128xf32>
    %35 = arith.divf %33, %34 : vector<128x128xf32>
    %36 = tpu.iota {dimensions = array<i32: 1>} : vector<128x128xi32>
    %c0_i32 = arith.constant 0 : i32
    %37 = vector.broadcast %c0_i32 : i32 to vector<128x128xi32>
    %38 = arith.cmpi eq, %36, %37 : vector<128x128xi32>
    %c0_22 = arith.constant 0 : index
    %c0_23 = arith.constant 0 : index
    %39 = vector.load %arg8[%c0_22, %c0_23] : memref<128x128xbf16, #tpu.memory_space<vmem>>, vector<128x128xbf16>
    %40 = arith.truncf %35 : vector<128x128xf32> to vector<128x128xbf16>
    %41 = arith.select %38, %39, %40 : vector<128x128xi1>, vector<128x128xbf16>
    %c0_24 = arith.constant 0 : index
    %c0_25 = arith.constant 0 : index
    %42 = vector.load %arg8[%c0_24, %c0_25] : memref<128x128xbf16, #tpu.memory_space<vmem>>, vector<128x128xbf16>
    tpu.vector_store %arg8[%c0_24, %c0_25], %41 {strides = array<i32>} : memref<128x128xbf16, #tpu.memory_space<vmem>>, vector<128x128xbf16>,
    return
  }
  func.func @transform_0(%arg0: i32) -> (i32, i32) {
    %c0_i32 = arith.constant 0 : i32
    %c0_i32_0 = arith.constant 0 : i32
    return %arg0, %c0_i32 : i32, i32
  }
  func.func @transform_1(%arg0: i32) -> (i32, i32) {
    %c0_i32 = arith.constant 0 : i32
    %c0_i32_0 = arith.constant 0 : i32
    %c0_i32_1 = arith.constant 0 : i32
    return %c0_i32, %c0_i32_0 : i32, i32
  }
  func.func @transform_2(%arg0: i32) -> (i32, i32) {
    %c0_i32 = arith.constant 0 : i32
    %c0_i32_0 = arith.constant 0 : i32
    %c0_i32_1 = arith.constant 0 : i32
    return %c0_i32, %c0_i32_0 : i32, i32
  }
  func.func @transform_3(%arg0: i32) -> (i32, i32) {
    %c0_i32 = arith.constant 0 : i32
    %c0_i32_0 = arith.constant 0 : i32
    %c0_i32_1 = arith.constant 0 : i32
    return %c0_i32, %c0_i32_0 : i32, i32
  }
  func.func @transform_4(%arg0: i32) -> (i32, i32) {
    %c0_i32 = arith.constant 0 : i32
    %c0_i32_0 = arith.constant 0 : i32
    %c0_i32_1 = arith.constant 0 : i32
    return %c0_i32, %c0_i32_0 : i32, i32
  }
  func.func @transform_5(%arg0: i32) -> (i32, i32) {
    %c0_i32 = arith.constant 0 : i32
    %c0_i32_0 = arith.constant 0 : i32
    %c0_i32_1 = arith.constant 0 : i32
    return %c0_i32, %c0_i32_0 : i32, i32
  }
  func.func @transform_6(%arg0: i32) -> (i32, i32) {
    %c0_i32 = arith.constant 0 : i32
    %c0_i32_0 = arith.constant 0 : i32
    %c0_i32_1 = arith.constant 0 : i32
    return %c0_i32, %c0_i32_0 : i32, i32
  }
  func.func @transform_7(%arg0: i32) -> (i32, i32) {
    %c0_i32 = arith.constant 0 : i32
    %c0_i32_0 = arith.constant 0 : i32
    return %arg0, %c0_i32 : i32, i32
  }
}

</mosaic_0001>

<llo_original>
// kernel: sub.25
$region0: #{sub.25}
  #allocation0 [shape = 's32[1]{0}', space=sflag, size = 0x4, scoped, tag = 'scoped memory for sub.25']
  %s0 = inlined_call_operand.vmem [shape: f32[2,3,1], index: 0, kind: input, shape index: {}]
  %s1 = inlined_call_operand.vmem [shape: f32[2,3,1], index: 1, kind: input, shape index: {}]
  %s2 = inlined_call_operand.vmem [shape: bf16[2,3,1], index: 2, kind: output, shape index: {}]
  %v3 = vld [vmem:[%s0] sm:$0x3]
  %v4 = vld [vmem:[%s1] sm:$0x3]
  %5 = xla_tuple %v3, %v4
  %6 = xla_tuple %5
  %v7 = vsub.f32 %v3, %v4
  %8 = xla_tuple %v7
  %v9 = vpack.c.bf16 0.0, %v7
  %10 = vst [vmem:[%s2] sm:$0x1] %v9

// kernel: geco_forward.1
$region0: #{geco_forward.1}
  #allocation0 [shape = 'u32[]', space=smem, size = 0x4, offset = 0x4, fixed_abs, tag = 'smem constant byte address 0x4 - core index']
  #allocation1 [shape = 'u32[144,128]{1,0:T(1,128)}', space=vmem, size = 0x12000, scoped, tag = 'internal scratch']
  %s0 = inlined_call_operand.vmem [shape: bf16[128,256], index: 0, kind: input, shape index: {}]
  %s1 = inlined_call_operand.vmem [shape: bf16[256,384], index: 1, kind: input, shape index: {}]
  %s2 = inlined_call_operand.vmem [shape: f32[1,384], index: 2, kind: input, shape index: {}]
  %s3 = inlined_call_operand.vmem [shape: bf16[256,256], index: 3, kind: input, shape index: {}]
  %s4 = inlined_call_operand.vmem [shape: f32[1,256], index: 4, kind: input, shape index: {}]
  %s5 = inlined_call_operand.vmem [shape: bf16[256,128], index: 5, kind: input, shape index: {}]
  %s6 = inlined_call_operand.vmem [shape: f32[1,128], index: 6, kind: input, shape index: {}]
  %s7 = inlined_call_operand.vmem [shape: bf16[128,128], index: 7, kind: output, shape index: {}]
  %s8 = sld [smem:[#allocation0]]
  $region38: #{geco_forward.1} parent=0
    _
  %s10 = ssub.s32 1, %s8
  %s11 = scalar_select 0, %s10, %s8
  // Predicated region
  $region2: #{geco_forward.1} parent=0 // pred_check
    _
  $region3: #{geco_forward.1} parent=0 // pred_check_branch
    %13 = sbr.rel (0) target = $region5
  $region4: #{geco_forward.1} parent=0 // pred_region
    _
  $region5: #{geco_forward.1} parent=0 // pred_fallthru
    _
  // Predicated region
  $region6: #{geco_forward.1} parent=0 // pred_check
    _
  $region7: #{geco_forward.1} parent=0 // pred_check_branch
    %15 = sbr.rel (0) target = $region9
  $region8: #{geco_forward.1} parent=0 // pred_region
    _
  $region9: #{geco_forward.1} parent=0 // pred_fallthru
    _
  // Predicated region
  $region10: #{geco_forward.1} parent=0 // pred_check
    _
  $region11: #{geco_forward.1} parent=0 // pred_check_branch
    %17 = sbr.rel (0) target = $region13
  $region12: #{geco_forward.1} parent=0 // pred_region
    _
  $region13: #{geco_forward.1} parent=0 // pred_fallthru
    _
  // Predicated region
  $region14: #{geco_forward.1} parent=0 // pred_check
    _
  $region15: #{geco_forward.1} parent=0 // pred_check_branch
    %19 = sbr.rel (0) target = $region17
  $region16: #{geco_forward.1} parent=0 // pred_region
    _
  $region17: #{geco_forward.1} parent=0 // pred_fallthru
    _
  // Predicated region
  $region18: #{geco_forward.1} parent=0 // pred_check
    _
  $region19: #{geco_forward.1} parent=0 // pred_check_branch
    %21 = sbr.rel (0) target = $region21
  $region20: #{geco_forward.1} parent=0 // pred_region
    _
  $region21: #{geco_forward.1} parent=0 // pred_fallthru
    _
  // Predicated region
  $region22: #{geco_forward.1} parent=0 // pred_check
    _
  $region23: #{geco_forward.1} parent=0 // pred_check_branch
    %23 = sbr.rel (0) target = $region25
  $region24: #{geco_forward.1} parent=0 // pred_region
    _
  $region25: #{geco_forward.1} parent=0 // pred_fallthru
    _
  // Predicated region
  $region26: #{geco_forward.1} parent=0 // pred_check
    _
  $region27: #{geco_forward.1} parent=0 // pred_check_branch
    %25 = sbr.rel (0) target = $region29
  $region28: #{geco_forward.1} parent=0 // pred_region
    _
  $region29: #{geco_forward.1} parent=0 // pred_fallthru
    _
  %v27 = vld [vmem:[%s0] sm:$0xff]
  %v28 = vld [vmem:[%s0 + $0x8] sm:$0xff]
  %v29 = vld [vmem:[%s0 + $0x10] sm:$0xff]
  %v30 = vld [vmem:[%s0 + $0x18] sm:$0xff]
  %v31 = vld [vmem:[%s0 + $0x20] sm:$0xff]
  %v32 = vld [vmem:[%s0 + $0x28] sm:$0xff]
  %v33 = vld [vmem:[%s0 + $0x30] sm:$0xff]
  %v34 = vld [vmem:[%s0 + $0x38] sm:$0xff]
  %v35 = vld [vmem:[%s0 + $0x40] sm:$0xff]
  %v36 = vld [vmem:[%s0 + $0x48] sm:$0xff]
  %v37 = vld [vmem:[%s0 + $0x50] sm:$0xff]
  %v38 = vld [vmem:[%s0 + $0x58] sm:$0xff]
  %v39 = vld [vmem:[%s0 + $0x60] sm:$0xff]
  %v40 = vld [vmem:[%s0 + $0x68] sm:$0xff]
  %v41 = vld [vmem:[%s0 + $0x70] sm:$0xff]
  %v42 = vld [vmem:[%s0 + $0x78] sm:$0xff]
  %v43 = vld [vmem:[%s1] sm:$0xff]
  %v44 = vld [vmem:[%s1 + $0x8] sm:$0xf]
  %v45 = vld [vmem:[%s1 + $0xc] sm:$0xff]
  %v46 = vld [vmem:[%s1 + $0x14] sm:$0xf]
  %v47 = vld [vmem:[%s1 + $0x18] sm:$0xff]
  %v48 = vld [vmem:[%s1 + $0x20] sm:$0xf]
  %v49 = vld [vmem:[%s1 + $0x24] sm:$0xff]
  %v50 = vld [vmem:[%s1 + $0x2c] sm:$0xf]
  %v51 = vld [vmem:[%s1 + $0x30] sm:$0xff]
  %v52 = vld [vmem:[%s1 + $0x38] sm:$0xf]
  %v53 = vld [vmem:[%s1 + $0x3c] sm:$0xff]
  %v54 = vld [vmem:[%s1 + $0x44] sm:$0xf]
  %v55 = vld [vmem:[%s1 + $0x48] sm:$0xff]
  %v56 = vld [vmem:[%s1 + $0x50] sm:$0xf]
  %v57 = vld [vmem:[%s1 + $0x54] sm:$0xff]
  %v58 = vld [vmem:[%s1 + $0x5c] sm:$0xf]
  %v59 = vld [vmem:[%s1 + $0x60] sm:$0xff]
  %v60 = vld [vmem:[%s1 + $0x68] sm:$0xf]
  %v61 = vld [vmem:[%s1 + $0x6c] sm:$0xff]
  %v62 = vld [vmem:[%s1 + $0x74] sm:$0xf]
  %v63 = vld [vmem:[%s1 + $0x78] sm:$0xff]
  %v64 = vld [vmem:[%s1 + $0x80] sm:$0xf]
  %v65 = vld [vmem:[%s1 + $0x84] sm:$0xff]
  %v66 = vld [vmem:[%s1 + $0x8c] sm:$0xf]
  %v67 = vld [vmem:[%s1 + $0x90] sm:$0xff]
  %v68 = vld [vmem:[%s1 + $0x98] sm:$0xf]
  %v69 = vld [vmem:[%s1 + $0x9c] sm:$0xff]
  %v70 = vld [vmem:[%s1 + $0xa4] sm:$0xf]
  %v71 = vld [vmem:[%s1 + $0xa8] sm:$0xff]
  %v72 = vld [vmem:[%s1 + $0xb0] sm:$0xf]
  %v73 = vld [vmem:[%s1 + $0xb4] sm:$0xff]
  %v74 = vld [vmem:[%s1 + $0xbc] sm:$0xf]
  %v75 = vld [vmem:[%s1 + $0xc0] sm:$0xff]
  %v76 = vld [vmem:[%s1 + $0xc8] sm:$0xf]
  %v77 = vld [vmem:[%s1 + $0xcc] sm:$0xff]
  %v78 = vld [vmem:[%s1 + $0xd4] sm:$0xf]
  %v79 = vld [vmem:[%s1 + $0xd8] sm:$0xff]
  %v80 = vld [vmem:[%s1 + $0xe0] sm:$0xf]
  %v81 = vld [vmem:[%s1 + $0xe4] sm:$0xff]
  %v82 = vld [vmem:[%s1 + $0xec] sm:$0xf]
  %v83 = vld [vmem:[%s1 + $0xf0] sm:$0xff]
  %v84 = vld [vmem:[%s1 + $0xf8] sm:$0xf]
  %v85 = vld [vmem:[%s1 + $0xfc] sm:$0xff]
  %v86 = vld [vmem:[%s1 + $0x104] sm:$0xf]
  %v87 = vld [vmem:[%s1 + $0x108] sm:$0xff]
  %v88 = vld [vmem:[%s1 + $0x110] sm:$0xf]
  %v89 = vld [vmem:[%s1 + $0x114] sm:$0xff]
  %v90 = vld [vmem:[%s1 + $0x11c] sm:$0xf]
  %v91 = vld [vmem:[%s1 + $0x120] sm:$0xff]
  %v92 = vld [vmem:[%s1 + $0x128] sm:$0xf]
  %v93 = vld [vmem:[%s1 + $0x12c] sm:$0xff]
  %v94 = vld [vmem:[%s1 + $0x134] sm:$0xf]
  %v95 = vld [vmem:[%s1 + $0x138] sm:$0xff]
  %v96 = vld [vmem:[%s1 + $0x140] sm:$0xf]
  %v97 = vld [vmem:[%s1 + $0x144] sm:$0xff]
  %v98 = vld [vmem:[%s1 + $0x14c] sm:$0xf]
  %v99 = vld [vmem:[%s1 + $0x150] sm:$0xff]
  %v100 = vld [vmem:[%s1 + $0x158] sm:$0xf]
  %v101 = vld [vmem:[%s1 + $0x15c] sm:$0xff]
  %v102 = vld [vmem:[%s1 + $0x164] sm:$0xf]
  %v103 = vld [vmem:[%s1 + $0x168] sm:$0xff]
  %v104 = vld [vmem:[%s1 + $0x170] sm:$0xf]
  %v105 = vld [vmem:[%s1 + $0x174] sm:$0xff]
  %v106 = vld [vmem:[%s1 + $0x17c] sm:$0xf]
  %v107 = vld [vmem:[%s2] sm:$0x7]
  %v109 = vlaneseq
  %v110 = vshrl.u32 %v109, 7
  %v111 = vsub.s32 0, %v110
  %v112 = vrot.slane %v107, %v111
  %v113 = vlaneseq
  %v114 = vshrl.u32 %v113, 7
  %v115 = vsub.s32 1, %v114
  %v116 = vrot.slane %v107, %v115
  %v117 = vlaneseq
  %v118 = vshrl.u32 %v117, 7
  %v119 = vsub.s32 2, %v118
  %v120 = vrot.slane %v107, %v119
  %v140 = vunpack.c.l.b16 %v27
  %v141 = vunpack.c.h.b16 %v27
  %v142 = vunpack.c.l.b16 %v28
  %v143 = vunpack.c.h.b16 %v28
  %v144 = vunpack.c.l.b16 %v29
  %v145 = vunpack.c.h.b16 %v29
  %v146 = vunpack.c.l.b16 %v30
  %v147 = vunpack.c.h.b16 %v30
  %v148 = vunpack.c.l.b16 %v31
  %v149 = vunpack.c.h.b16 %v31
  %v150 = vunpack.c.l.b16 %v32
  %v151 = vunpack.c.h.b16 %v32
  %v152 = vunpack.c.l.b16 %v33
  %v153 = vunpack.c.h.b16 %v33
  %v154 = vunpack.c.l.b16 %v34
  %v155 = vunpack.c.h.b16 %v34
  %v156 = vunpack.c.l.b16 %v35
  %v157 = vunpack.c.h.b16 %v35
  %v158 = vunpack.c.l.b16 %v36
  %v159 = vunpack.c.h.b16 %v36
  %v160 = vunpack.c.l.b16 %v37
  %v161 = vunpack.c.h.b16 %v37
  %v162 = vunpack.c.l.b16 %v38
  %v163 = vunpack.c.h.b16 %v38
  %v164 = vunpack.c.l.b16 %v39
  %v165 = vunpack.c.h.b16 %v39
  %v166 = vunpack.c.l.b16 %v40
  %v167 = vunpack.c.h.b16 %v40
  %v168 = vunpack.c.l.b16 %v41
  %v169 = vunpack.c.h.b16 %v41
  %v170 = vunpack.c.l.b16 %v42
  %v171 = vunpack.c.h.b16 %v42
  %v172 = vpack.c.b16 %v142, %v140
  %v173 = vpack.c.b16 %v143, %v141
  %v174 = vpack.c.b16 %v146, %v144
  %v175 = vpack.c.b16 %v147, %v145
  %v176 = vpack.c.b16 %v150, %v148
  %v177 = vpack.c.b16 %v151, %v149
  %v178 = vpack.c.b16 %v154, %v152
  %v179 = vpack.c.b16 %v155, %v153
  %v180 = vpack.c.b16 %v158, %v156
  %v181 = vpack.c.b16 %v159, %v157
  %v182 = vpack.c.b16 %v162, %v160
  %v183 = vpack.c.b16 %v163, %v161
  %v184 = vpack.c.b16 %v166, %v164
  %v185 = vpack.c.b16 %v167, %v165
  %v186 = vpack.c.b16 %v170, %v168
  %v187 = vpack.c.b16 %v171, %v169
  %v268 = vunpack.c.l.b16 %v43
  %v269 = vunpack.c.h.b16 %v43
  %v270 = vunpack.c.l.b16 %v44
  %v271 = vunpack.c.l.b16 %v45
  %v272 = vunpack.c.h.b16 %v45
  %v273 = vunpack.c.l.b16 %v46
  %v274 = vunpack.c.l.b16 %v47
  %v275 = vunpack.c.h.b16 %v47
  %v276 = vunpack.c.l.b16 %v48
  %v277 = vunpack.c.l.b16 %v49
  %v278 = vunpack.c.h.b16 %v49
  %v279 = vunpack.c.l.b16 %v50
  %v280 = vunpack.c.l.b16 %v51
  %v281 = vunpack.c.h.b16 %v51
  %v282 = vunpack.c.l.b16 %v52
  %v283 = vunpack.c.l.b16 %v53
  %v284 = vunpack.c.h.b16 %v53
  %v285 = vunpack.c.l.b16 %v54
  %v286 = vunpack.c.l.b16 %v55
  %v287 = vunpack.c.h.b16 %v55
  %v288 = vunpack.c.l.b16 %v56
  %v289 = vunpack.c.l.b16 %v57
  %v290 = vunpack.c.h.b16 %v57
  %v291 = vunpack.c.l.b16 %v58
  %v292 = vunpack.c.l.b16 %v59
  %v293 = vunpack.c.h.b16 %v59
  %v294 = vunpack.c.l.b16 %v60
  %v295 = vunpack.c.l.b16 %v61
  %v296 = vunpack.c.h.b16 %v61
  %v297 = vunpack.c.l.b16 %v62
  %v298 = vunpack.c.l.b16 %v63
  %v299 = vunpack.c.h.b16 %v63
  %v300 = vunpack.c.l.b16 %v64
  %v301 = vunpack.c.l.b16 %v65
  %v302 = vunpack.c.h.b16 %v65
  %v303 = vunpack.c.l.b16 %v66
  %v304 = vunpack.c.l.b16 %v67
  %v305 = vunpack.c.h.b16 %v67
  %v306 = vunpack.c.l.b16 %v68
  %v307 = vunpack.c.l.b16 %v69
  %v308 = vunpack.c.h.b16 %v69
  %v309 = vunpack.c.l.b16 %v70
  %v310 = vunpack.c.l.b16 %v71
  %v311 = vunpack.c.h.b16 %v71
  %v312 = vunpack.c.l.b16 %v72
  %v313 = vunpack.c.l.b16 %v73
  %v314 = vunpack.c.h.b16 %v73
  %v315 = vunpack.c.l.b16 %v74
  %v316 = vunpack.c.l.b16 %v75
  %v317 = vunpack.c.h.b16 %v75
  %v318 = vunpack.c.l.b16 %v76
  %v319 = vunpack.c.l.b16 %v77
  %v320 = vunpack.c.h.b16 %v77
  %v321 = vunpack.c.l.b16 %v78
  %v322 = vunpack.c.l.b16 %v79
  %v323 = vunpack.c.h.b16 %v79
  %v324 = vunpack.c.l.b16 %v80
  %v325 = vunpack.c.l.b16 %v81
  %v326 = vunpack.c.h.b16 %v81
  %v327 = vunpack.c.l.b16 %v82
  %v328 = vunpack.c.l.b16 %v83
  %v329 = vunpack.c.h.b16 %v83
  %v330 = vunpack.c.l.b16 %v84
  %v331 = vunpack.c.l.b16 %v85
  %v332 = vunpack.c.h.b16 %v85
  %v333 = vunpack.c.l.b16 %v86
  %v334 = vunpack.c.l.b16 %v87
  %v335 = vunpack.c.h.b16 %v87
  %v336 = vunpack.c.l.b16 %v88
  %v337 = vunpack.c.l.b16 %v89
  %v338 = vunpack.c.h.b16 %v89
  %v339 = vunpack.c.l.b16 %v90
  %v340 = vunpack.c.l.b16 %v91
  %v341 = vunpack.c.h.b16 %v91
  %v342 = vunpack.c.l.b16 %v92
  %v343 = vunpack.c.l.b16 %v93
  %v344 = vunpack.c.h.b16 %v93
  %v345 = vunpack.c.l.b16 %v94
  %v346 = vunpack.c.l.b16 %v95
  %v347 = vunpack.c.h.b16 %v95
  %v348 = vunpack.c.l.b16 %v96
  %v349 = vunpack.c.l.b16 %v97
  %v350 = vunpack.c.h.b16 %v97
  %v351 = vunpack.c.l.b16 %v98
  %v352 = vunpack.c.l.b16 %v99
  %v353 = vunpack.c.h.b16 %v99
  %v354 = vunpack.c.l.b16 %v100
  %v355 = vunpack.c.l.b16 %v101
  %v356 = vunpack.c.h.b16 %v101
  %v357 = vunpack.c.l.b16 %v102
  %v358 = vunpack.c.l.b16 %v103
  %v359 = vunpack.c.h.b16 %v103
  %v360 = vunpack.c.l.b16 %v104
  %v361 = vunpack.c.l.b16 %v105
  %v362 = vunpack.c.h.b16 %v105
  %v363 = vunpack.c.l.b16 %v106
  %v364 = vpack.c.b16 %v271, %v268
  %v365 = vpack.c.b16 %v272, %v269
  %v366 = vpack.c.b16 %v273, %v270
  %v367 = vpack.c.b16 %v277, %v274
  %v368 = vpack.c.b16 %v278, %v275
  %v369 = vpack.c.b16 %v279, %v276
  %v370 = vpack.c.b16 %v283, %v280
  %v371 = vpack.c.b16 %v284, %v281
  %v372 = vpack.c.b16 %v285, %v282
  %v373 = vpack.c.b16 %v289, %v286
  %v374 = vpack.c.b16 %v290, %v287
  %v375 = vpack.c.b16 %v291, %v288
  %v376 = vpack.c.b16 %v295, %v292
  %v377 = vpack.c.b16 %v296, %v293
  %v378 = vpack.c.b16 %v297, %v294
  %v379 = vpack.c.b16 %v301, %v298
  %v380 = vpack.c.b16 %v302, %v299
  %v381 = vpack.c.b16 %v303, %v300
  %v382 = vpack.c.b16 %v307, %v304
  %v383 = vpack.c.b16 %v308, %v305
  %v384 = vpack.c.b16 %v309, %v306
  %v385 = vpack.c.b16 %v313, %v310
  %v386 = vpack.c.b16 %v314, %v311
  %v387 = vpack.c.b16 %v315, %v312
  %v388 = vpack.c.b16 %v319, %v316
  %v389 = vpack.c.b16 %v320, %v317
  %v390 = vpack.c.b16 %v321, %v318
  %v391 = vpack.c.b16 %v325, %v322
  %v392 = vpack.c.b16 %v326, %v323
  %v393 = vpack.c.b16 %v327, %v324
  %v394 = vpack.c.b16 %v331, %v328
  %v395 = vpack.c.b16 %v332, %v329
  %v396 = vpack.c.b16 %v333, %v330
  %v397 = vpack.c.b16 %v337, %v334
  %v398 = vpack.c.b16 %v338, %v335
  %v399 = vpack.c.b16 %v339, %v336
  %v400 = vpack.c.b16 %v343, %v340
  %v401 = vpack.c.b16 %v344, %v341
  %v402 = vpack.c.b16 %v345, %v342
  %v403 = vpack.c.b16 %v349, %v346
  %v404 = vpack.c.b16 %v350, %v347
  %v405 = vpack.c.b16 %v351, %v348
  %v406 = vpack.c.b16 %v355, %v352
  %v407 = vpack.c.b16 %v356, %v353
  %v408 = vpack.c.b16 %v357, %v354
  %v409 = vpack.c.b16 %v361, %v358
  %v410 = vpack.c.b16 %v362, %v359
  %v411 = vpack.c.b16 %v363, %v360
  %460 = vmatprep.subr.bf16.mxu0 %v386
  %461 = vmatpush1.bf16.msra.mxu0 %v385
  %462 = vmatprep.subr.bf16.mxu0 %v383
  %463 = vmatpush1.bf16.msra.mxu0 %v382
  %464 = vmatprep.subr.bf16.mxu0 %v380
  %465 = vmatpush1.bf16.msra.mxu0 %v379
  %466 = vmatprep.subr.bf16.mxu0 %v377
  %467 = vmatpush1.bf16.msra.mxu0 %v376
  %468 = vmatprep.subr.bf16.mxu0 %v374
  %469 = vmatpush1.bf16.msra.mxu0 %v373
  %470 = vmatprep.subr.bf16.mxu0 %v371
  %471 = vmatpush1.bf16.msra.mxu0 %v370
  %472 = vmatprep.subr.bf16.mxu0 %v368
  %473 = vmatpush1.bf16.msra.mxu0 %v367
  %474 = vmatprep.subr.bf16.mxu0 %v365
  %475 = vmatpush1.bf16.msra.mxu0 %v364
  %476 = vmatprep.subr.bf16.mxu0 %v410
  %477 = vmatpush2.bf16.msra.mxu0 %v409
  %478 = vmatprep.subr.bf16.mxu0 %v407
  %479 = vmatpush2.bf16.msra.mxu0 %v406
  %480 = vmatprep.subr.bf16.mxu0 %v404
  %481 = vmatpush2.bf16.msra.mxu0 %v403
  %482 = vmatprep.subr.bf16.mxu0 %v401
  %483 = vmatpush2.bf16.msra.mxu0 %v400
  %484 = vmatprep.subr.bf16.mxu0 %v398
  %485 = vmatpush2.bf16.msra.mxu0 %v397
  %486 = vmatprep.subr.bf16.mxu0 %v395
  %487 = vmatpush2.bf16.msra.mxu0 %v394
  %488 = vmatprep.subr.bf16.mxu0 %v392
  %489 = vmatpush2.bf16.msra.mxu0 %v391
  %490 = vmatprep.subr.bf16.mxu0 %v389
  %491 = vmatpush2.bf16.msra.mxu0 %v388
  %492 = vmatprep.mubr.bf16.mxu0 %v173
  %493 = vmatmul.mubr.bf16.gmra.mxu0 %v172
  %v494 = vpop.f32.mrf.mxu0
  %v495 = vadd.f32 %v112, %v494
  %v496 = vpop.f32.mrf.mxu0
  %v497 = vadd.f32 %v116, %v496
  %v498 = vpop.f32.mrf.mxu0
  %v499 = vadd.f32 %v112, %v498
  %v500 = vpop.f32.mrf.mxu0
  %v501 = vadd.f32 %v116, %v500
  %502 = vmatprep.mubr.bf16.mxu0 %v175
  %503 = vmatmul.mubr.bf16.gmra.mxu0 %v174
  %v504 = vpop.f32.mrf.mxu0
  %v505 = vadd.f32 %v112, %v504
  %v506 = vpop.f32.mrf.mxu0
  %v507 = vadd.f32 %v116, %v506
  %v508 = vpop.f32.mrf.mxu0
  %v509 = vadd.f32 %v112, %v508
  %v510 = vpop.f32.mrf.mxu0
  %v511 = vadd.f32 %v116, %v510
  %512 = vmatprep.mubr.bf16.mxu0 %v177
  %513 = vmatmul.mubr.bf16.gmra.mxu0 %v176
  %v514 = vpop.f32.mrf.mxu0
  %v515 = vadd.f32 %v112, %v514
  %v516 = vpop.f32.mrf.mxu0
  %v517 = vadd.f32 %v116, %v516
  %v518 = vpop.f32.mrf.mxu0
  %v519 = vadd.f32 %v112, %v518
  %v520 = vpop.f32.mrf.mxu0
  %v521 = vadd.f32 %v116, %v520
  %522 = vmatprep.mubr.bf16.mxu0 %v179
  %523 = vmatmul.mubr.bf16.gmra.mxu0 %v178
  %v524 = vpop.f32.mrf.mxu0
  %v525 = vadd.f32 %v112, %v524
  %v526 = vpop.f32.mrf.mxu0
  %v527 = vadd.f32 %v116, %v526
  %v528 = vpop.f32.mrf.mxu0
  %v529 = vadd.f32 %v112, %v528
  %v530 = vpop.f32.mrf.mxu0
  %v531 = vadd.f32 %v116, %v530
  %532 = vmatprep.mubr.bf16.mxu0 %v181
  %533 = vmatmul.mubr.bf16.gmra.mxu0 %v180
  %v534 = vpop.f32.mrf.mxu0
  %v535 = vadd.f32 %v112, %v534
  %v536 = vpop.f32.mrf.mxu0
  %v537 = vadd.f32 %v116, %v536
  %v538 = vpop.f32.mrf.mxu0
  %v539 = vadd.f32 %v112, %v538
  %v540 = vpop.f32.mrf.mxu0
  %v541 = vadd.f32 %v116, %v540
  %542 = vmatprep.mubr.bf16.mxu0 %v183
  %543 = vmatmul.mubr.bf16.gmra.mxu0 %v182
  %v544 = vpop.f32.mrf.mxu0
  %v545 = vadd.f32 %v112, %v544
  %v546 = vpop.f32.mrf.mxu0
  %v547 = vadd.f32 %v116, %v546
  %v548 = vpop.f32.mrf.mxu0
  %v549 = vadd.f32 %v112, %v548
  %v550 = vpop.f32.mrf.mxu0
  %v551 = vadd.f32 %v116, %v550
  %552 = vmatprep.mubr.bf16.mxu0 %v185
  %553 = vmatmul.mubr.bf16.gmra.mxu0 %v184
  %v554 = vpop.f32.mrf.mxu0
  %v555 = vadd.f32 %v112, %v554
  %v556 = vpop.f32.mrf.mxu0
  %v557 = vadd.f32 %v116, %v556
  %v558 = vpop.f32.mrf.mxu0
  %v559 = vadd.f32 %v112, %v558
  %v560 = vpop.f32.mrf.mxu0
  %v561 = vadd.f32 %v116, %v560
  %562 = vmatprep.mubr.bf16.mxu0 %v187
  %563 = vmatmul.mubr.bf16.gmra.mxu0 %v186
  %v564 = vpop.f32.mrf.mxu0
  %v565 = vadd.f32 %v112, %v564
  %v566 = vpop.f32.mrf.mxu0
  %v567 = vadd.f32 %v116, %v566
  %v568 = vpop.f32.mrf.mxu0
  %v569 = vadd.f32 %v112, %v568
  %v570 = vpop.f32.mrf.mxu0
  %v571 = vadd.f32 %v116, %v570
  %572 = vdwg.mxu0
  %573 = vmatprep.subr.bf16.mxu0 0
  %574 = vmatpush1.bf16.msra.mxu0 %v387
  %575 = vmatprep.subr.bf16.mxu0 0
  %576 = vmatpush1.bf16.msra.mxu0 %v384
  %577 = vmatprep.subr.bf16.mxu0 0
  %578 = vmatpush1.bf16.msra.mxu0 %v381
  %579 = vmatprep.subr.bf16.mxu0 0
  %580 = vmatpush1.bf16.msra.mxu0 %v378
  %581 = vmatprep.subr.bf16.mxu0 0
  %582 = vmatpush1.bf16.msra.mxu0 %v375
  %583 = vmatprep.subr.bf16.mxu0 0
  %584 = vmatpush1.bf16.msra.mxu0 %v372
  %585 = vmatprep.subr.bf16.mxu0 0
  %586 = vmatpush1.bf16.msra.mxu0 %v369
  %587 = vmatprep.subr.bf16.mxu0 0
  %588 = vmatpush1.bf16.msra.mxu0 %v366
  %589 = vmatprep.subr.bf16.mxu0 0
  %590 = vmatpush2.bf16.msra.mxu0 %v411
  %591 = vmatprep.subr.bf16.mxu0 0
  %592 = vmatpush2.bf16.msra.mxu0 %v408
  %593 = vmatprep.subr.bf16.mxu0 0
  %594 = vmatpush2.bf16.msra.mxu0 %v405
  %595 = vmatprep.subr.bf16.mxu0 0
  %596 = vmatpush2.bf16.msra.mxu0 %v402
  %597 = vmatprep.subr.bf16.mxu0 0
  %598 = vmatpush2.bf16.msra.mxu0 %v399
  %599 = vmatprep.subr.bf16.mxu0 0
  %600 = vmatpush2.bf16.msra.mxu0 %v396
  %601 = vmatprep.subr.bf16.mxu0 0
  %602 = vmatpush2.bf16.msra.mxu0 %v393
  %603 = vmatprep.subr.bf16.mxu0 0
  %604 = vmatpush2.bf16.msra.mxu0 %v390
  %605 = vmatprep.mubr.bf16.mxu0 %v173
  %606 = vmatmul.mubr.bf16.gmra.mxu0 %v172
  %v607 = vpop.f32.mrf.mxu0
  %v608 = vadd.f32 %v120, %v607
  %v609 = vpop.f32.mrf.mxu0
  %v610 = vpop.f32.mrf.mxu0
  %v611 = vadd.f32 %v120, %v610
  %v612 = vpop.f32.mrf.mxu0
  %613 = vmatprep.mubr.bf16.mxu0 %v175
  %614 = vmatmul.mubr.bf16.gmra.mxu0 %v174
  %v615 = vpop.f32.mrf.mxu0
  %v616 = vadd.f32 %v120, %v615
  %v617 = vpop.f32.mrf.mxu0
  %v618 = vpop.f32.mrf.mxu0
  %v619 = vadd.f32 %v120, %v618
  %v620 = vpop.f32.mrf.mxu0
  %621 = vmatprep.mubr.bf16.mxu0 %v177
  %622 = vmatmul.mubr.bf16.gmra.mxu0 %v176
  %v623 = vpop.f32.mrf.mxu0
  %v624 = vadd.f32 %v120, %v623
  %v625 = vpop.f32.mrf.mxu0
  %v626 = vpop.f32.mrf.mxu0
  %v627 = vadd.f32 %v120, %v626
  %v628 = vpop.f32.mrf.mxu0
  %629 = vmatprep.mubr.bf16.mxu0 %v179
  %630 = vmatmul.mubr.bf16.gmra.mxu0 %v178
  %v631 = vpop.f32.mrf.mxu0
  %v632 = vadd.f32 %v120, %v631
  %v633 = vpop.f32.mrf.mxu0
  %v634 = vpop.f32.mrf.mxu0
  %v635 = vadd.f32 %v120, %v634
  %v636 = vpop.f32.mrf.mxu0
  %637 = vmatprep.mubr.bf16.mxu0 %v181
  %638 = vmatmul.mubr.bf16.gmra.mxu0 %v180
  %v639 = vpop.f32.mrf.mxu0
  %v640 = vadd.f32 %v120, %v639
  %v641 = vpop.f32.mrf.mxu0
  %v642 = vpop.f32.mrf.mxu0
  %v643 = vadd.f32 %v120, %v642
  %v644 = vpop.f32.mrf.mxu0
  %645 = vmatprep.mubr.bf16.mxu0 %v183
  %646 = vmatmul.mubr.bf16.gmra.mxu0 %v182
  %v647 = vpop.f32.mrf.mxu0
  %v648 = vadd.f32 %v120, %v647
  %v649 = vpop.f32.mrf.mxu0
  %v650 = vpop.f32.mrf.mxu0
  %v651 = vadd.f32 %v120, %v650
  %v652 = vpop.f32.mrf.mxu0
  %653 = vmatprep.mubr.bf16.mxu0 %v185
  %654 = vmatmul.mubr.bf16.gmra.mxu0 %v184
  %v655 = vpop.f32.mrf.mxu0
  %v656 = vadd.f32 %v120, %v655
  %v657 = vpop.f32.mrf.mxu0
  %v658 = vpop.f32.mrf.mxu0
  %v659 = vadd.f32 %v120, %v658
  %v660 = vpop.f32.mrf.mxu0
  %661 = vmatprep.mubr.bf16.mxu0 %v187
  %662 = vmatmul.mubr.bf16.gmra.mxu0 %v186
  %v663 = vpop.f32.mrf.mxu0
  %v664 = vadd.f32 %v120, %v663
  %v665 = vpop.f32.mrf.mxu0
  %v666 = vpop.f32.mrf.mxu0
  %v667 = vadd.f32 %v120, %v666
  %v668 = vpop.f32.mrf.mxu0
  %669 = vdwg.mxu0
  %v670 = vmax.f32 %v495, 0.0
  %v671 = vmax.f32 %v497, 0.0
  %v672 = vmax.f32 %v499, 0.0
  %v673 = vmax.f32 %v501, 0.0
  %v674 = vmax.f32 %v505, 0.0
  %v675 = vmax.f32 %v507, 0.0
  %v676 = vmax.f32 %v509, 0.0
  %v677 = vmax.f32 %v511, 0.0
  %v678 = vmax.f32 %v515, 0.0
  %v679 = vmax.f32 %v517, 0.0
  %v680 = vmax.f32 %v519, 0.0
  %v681 = vmax.f32 %v521, 0.0
  %v682 = vmax.f32 %v525, 0.0
  %v683 = vmax.f32 %v527, 0.0
  %v684 = vmax.f32 %v529, 0.0
  %v685 = vmax.f32 %v531, 0.0
  %v686 = vmax.f32 %v535, 0.0
  %v687 = vmax.f32 %v537, 0.0
  %v688 = vmax.f32 %v539, 0.0
  %v689 = vmax.f32 %v541, 0.0
  %v690 = vmax.f32 %v545, 0.0
  %v691 = vmax.f32 %v547, 0.0
  %v692 = vmax.f32 %v549, 0.0
  %v693 = vmax.f32 %v551, 0.0
  %v694 = vmax.f32 %v555, 0.0
  %v695 = vmax.f32 %v557, 0.0
  %v696 = vmax.f32 %v559, 0.0
  %v697 = vmax.f32 %v561, 0.0
  %v698 = vmax.f32 %v565, 0.0
  %v699 = vmax.f32 %v567, 0.0
  %v700 = vmax.f32 %v569, 0.0
  %v701 = vmax.f32 %v571, 0.0
  %v702 = vpack.c.bf16 %v672, %v670
  %v703 = vpack.c.bf16 %v673, %v671
  %v704 = vpack.c.bf16 %v676, %v674
  %v705 = vpack.c.bf16 %v677, %v675
  %v706 = vpack.c.bf16 %v680, %v678
  %v707 = vpack.c.bf16 %v681, %v679
  %v708 = vpack.c.bf16 %v684, %v682
  %v709 = vpack.c.bf16 %v685, %v683
  %v710 = vpack.c.bf16 %v688, %v686
  %v711 = vpack.c.bf16 %v689, %v687
  %v712 = vpack.c.bf16 %v692, %v690
  %v713 = vpack.c.bf16 %v693, %v691
  %v714 = vpack.c.bf16 %v696, %v694
  %v715 = vpack.c.bf16 %v697, %v695
  %v716 = vpack.c.bf16 %v700, %v698
  %v717 = vpack.c.bf16 %v701, %v699
  %vm718 = vcmp.ge.f32.partialorder %v608, 0.0
  %vm719 = vcmp.ge.f32.partialorder %v611, 0.0
  %vm720 = vcmp.ge.f32.partialorder %v616, 0.0
  %vm721 = vcmp.ge.f32.partialorder %v619, 0.0
  %vm722 = vcmp.ge.f32.partialorder %v624, 0.0
  %vm723 = vcmp.ge.f32.partialorder %v627, 0.0
  %vm724 = vcmp.ge.f32.partialorder %v632, 0.0
  %vm725 = vcmp.ge.f32.partialorder %v635, 0.0
  %vm726 = vcmp.ge.f32.partialorder %v640, 0.0
  %vm727 = vcmp.ge.f32.partialorder %v643, 0.0
  %vm728 = vcmp.ge.f32.partialorder %v648, 0.0
  %vm729 = vcmp.ge.f32.partialorder %v651, 0.0
  %vm730 = vcmp.ge.f32.partialorder %v656, 0.0
  %vm731 = vcmp.ge.f32.partialorder %v659, 0.0
  %vm732 = vcmp.ge.f32.partialorder %v664, 0.0
  %vm733 = vcmp.ge.f32.partialorder %v667, 0.0
  %v734 = vmul.f32 %v608, 0.01
  %v735 = vmul.f32 %v611, 0.01
  %v736 = vmul.f32 %v616, 0.01
  %v737 = vmul.f32 %v619, 0.01
  %v738 = vmul.f32 %v624, 0.01
  %v739 = vmul.f32 %v627, 0.01
  %v740 = vmul.f32 %v632, 0.01
  %v741 = vmul.f32 %v635, 0.01
  %v742 = vmul.f32 %v640, 0.01
  %v743 = vmul.f32 %v643, 0.01
  %v744 = vmul.f32 %v648, 0.01
  %v745 = vmul.f32 %v651, 0.01
  %v746 = vmul.f32 %v656, 0.01
  %v747 = vmul.f32 %v659, 0.01
  %v748 = vmul.f32 %v664, 0.01
  %v749 = vmul.f32 %v667, 0.01
  %v750 = vsel %vm718, %v608, %v734
  %v751 = vsel %vm719, %v611, %v735
  %v752 = vsel %vm720, %v616, %v736
  %v753 = vsel %vm721, %v619, %v737
  %v754 = vsel %vm722, %v624, %v738
  %v755 = vsel %vm723, %v627, %v739
  %v756 = vsel %vm724, %v632, %v740
  %v757 = vsel %vm725, %v635, %v741
  %v758 = vsel %vm726, %v640, %v742
  %v759 = vsel %vm727, %v643, %v743
  %v760 = vsel %vm728, %v648, %v744
  %v761 = vsel %vm729, %v651, %v745
  %v762 = vsel %vm730, %v656, %v746
  %v763 = vsel %vm731, %v659, %v747
  %v764 = vsel %vm732, %v664, %v748
  %v765 = vsel %vm733, %v667, %v749
  %v766 = vpack.c.bf16 %v751, %v750
  %v767 = vpack.c.bf16 %v753, %v752
  %v768 = vpack.c.bf16 %v755, %v754
  %v769 = vpack.c.bf16 %v757, %v756
  %v770 = vpack.c.bf16 %v759, %v758
  %v771 = vpack.c.bf16 %v761, %v760
  %v772 = vpack.c.bf16 %v763, %v762
  %v773 = vpack.c.bf16 %v765, %v764
  %v782 = vunpack.c.l.b16 %v766
  %v783 = vunpack.c.h.b16 %v766
  %v784 = vunpack.c.l.b16 %v767
  %v785 = vunpack.c.h.b16 %v767
  %v786 = vunpack.c.l.b16 %v768
  %v787 = vunpack.c.h.b16 %v768
  %v788 = vunpack.c.l.b16 %v769
  %v789 = vunpack.c.h.b16 %v769
  %v790 = vunpack.c.l.b16 %v770
  %v791 = vunpack.c.h.b16 %v770
  %v792 = vunpack.c.l.b16 %v771
  %v793 = vunpack.c.h.b16 %v771
  %v794 = vunpack.c.l.b16 %v772
  %v795 = vunpack.c.h.b16 %v772
  %v796 = vunpack.c.l.b16 %v773
  %v797 = vunpack.c.h.b16 %v773
  %v798 = vpack.c.b16 %v782, %v782
  %v799 = vpack.c.b16 %v783, %v783
  %v800 = vpack.c.b16 %v784, %v784
  %v801 = vpack.c.b16 %v785, %v785
  %v802 = vpack.c.b16 %v786, %v786
  %v803 = vpack.c.b16 %v787, %v787
  %v804 = vpack.c.b16 %v788, %v788
  %v805 = vpack.c.b16 %v789, %v789
  %v806 = vpack.c.b16 %v790, %v790
  %v807 = vpack.c.b16 %v791, %v791
  %v808 = vpack.c.b16 %v792, %v792
  %v809 = vpack.c.b16 %v793, %v793
  %v810 = vpack.c.b16 %v794, %v794
  %v811 = vpack.c.b16 %v795, %v795
  %v812 = vpack.c.b16 %v796, %v796
  %v813 = vpack.c.b16 %v797, %v797
  %830 = vst [vmem:[%s7] sm:$0xf] %v798
  %831 = vst [vmem:[%s7 + $0x4] sm:$0xf] %v799
  %832 = vst [vmem:[%s7 + $0x8] sm:$0xf] %v800
  %833 = vst [vmem:[%s7 + $0xc] sm:$0xf] %v801
  %834 = vst [vmem:[%s7 + $0x10] sm:$0xf] %v802
  %835 = vst [vmem:[%s7 + $0x14] sm:$0xf] %v803
  %836 = vst [vmem:[%s7 + $0x18] sm:$0xf] %v804
  %837 = vst [vmem:[%s7 + $0x1c] sm:$0xf] %v805
  %838 = vst [vmem:[%s7 + $0x20] sm:$0xf] %v806
  %839 = vst [vmem:[%s7 + $0x24] sm:$0xf] %v807
  %840 = vst [vmem:[%s7 + $0x28] sm:$0xf] %v808
  %841 = vst [vmem:[%s7 + $0x2c] sm:$0xf] %v809
  %842 = vst [vmem:[%s7 + $0x30] sm:$0xf] %v810
  %843 = vst [vmem:[%s7 + $0x34] sm:$0xf] %v811
  %844 = vst [vmem:[%s7 + $0x38] sm:$0xf] %v812
  %845 = vst [vmem:[%s7 + $0x3c] sm:$0xf] %v813
  %v846 = vld [vmem:[%s3] sm:$0xff]
  %v847 = vld [vmem:[%s3 + $0x8] sm:$0xff]
  %v848 = vld [vmem:[%s3 + $0x10] sm:$0xff]
  %v849 = vld [vmem:[%s3 + $0x18] sm:$0xff]
  %v850 = vld [vmem:[%s3 + $0x20] sm:$0xff]
  %v851 = vld [vmem:[%s3 + $0x28] sm:$0xff]
  %v852 = vld [vmem:[%s3 + $0x30] sm:$0xff]
  %v853 = vld [vmem:[%s3 + $0x38] sm:$0xff]
  %v854 = vld [vmem:[%s3 + $0x40] sm:$0xff]
  %v855 = vld [vmem:[%s3 + $0x48] sm:$0xff]
  %v856 = vld [vmem:[%s3 + $0x50] sm:$0xff]
  %v857 = vld [vmem:[%s3 + $0x58] sm:$0xff]
  %v858 = vld [vmem:[%s3 + $0x60] sm:$0xff]
  %v859 = vld [vmem:[%s3 + $0x68] sm:$0xff]
  %v860 = vld [vmem:[%s3 + $0x70] sm:$0xff]
  %v861 = vld [vmem:[%s3 + $0x78] sm:$0xff]
  %v862 = vld [vmem:[%s3 + $0x80] sm:$0xff]
  %v863 = vld [vmem:[%s3 + $0x88] sm:$0xff]
  %v864 = vld [vmem:[%s3 + $0x90] sm:$0xff]
  %v865 = vld [vmem:[%s3 + $0x98] sm:$0xff]
  %v866 = vld [vmem:[%s3 + $0xa0] sm:$0xff]
  %v867 = vld [vmem:[%s3 + $0xa8] sm:$0xff]
  %v868 = vld [vmem:[%s3 + $0xb0] sm:$0xff]
  %v869 = vld [vmem:[%s3 + $0xb8] sm:$0xff]
  %v870 = vld [vmem:[%s3 + $0xc0] sm:$0xff]
  %v871 = vld [vmem:[%s3 + $0xc8] sm:$0xff]
  %v872 = vld [vmem:[%s3 + $0xd0] sm:$0xff]
  %v873 = vld [vmem:[%s3 + $0xd8] sm:$0xff]
  %v874 = vld [vmem:[%s3 + $0xe0] sm:$0xff]
  %v875 = vld [vmem:[%s3 + $0xe8] sm:$0xff]
  %v876 = vld [vmem:[%s3 + $0xf0] sm:$0xff]
  %v877 = vld [vmem:[%s3 + $0xf8] sm:$0xff]
  %v878 = vld [vmem:[%s4] sm:$0x3]
  %v880 = vlaneseq
  %v881 = vshrl.u32 %v880, 7
  %v882 = vsub.s32 0, %v881
  %v883 = vrot.slane %v878, %v882
  %v884 = vlaneseq
  %v885 = vshrl.u32 %v884, 7
  %v886 = vsub.s32 1, %v885
  %v887 = vrot.slane %v878, %v886
  %v922 = vunpack.c.l.b16 %v846
  %v923 = vunpack.c.h.b16 %v846
  %v924 = vunpack.c.l.b16 %v847
  %v925 = vunpack.c.h.b16 %v847
  %v926 = vunpack.c.l.b16 %v848
  %v927 = vunpack.c.h.b16 %v848
  %v928 = vunpack.c.l.b16 %v849
  %v929 = vunpack.c.h.b16 %v849
  %v930 = vunpack.c.l.b16 %v850
  %v931 = vunpack.c.h.b16 %v850
  %v932 = vunpack.c.l.b16 %v851
  %v933 = vunpack.c.h.b16 %v851
  %v934 = vunpack.c.l.b16 %v852
  %v935 = vunpack.c.h.b16 %v852
  %v936 = vunpack.c.l.b16 %v853
  %v937 = vunpack.c.h.b16 %v853
  %v938 = vunpack.c.l.b16 %v854
  %v939 = vunpack.c.h.b16 %v854
  %v940 = vunpack.c.l.b16 %v855
  %v941 = vunpack.c.h.b16 %v855
  %v942 = vunpack.c.l.b16 %v856
  %v943 = vunpack.c.h.b16 %v856
  %v944 = vunpack.c.l.b16 %v857
  %v945 = vunpack.c.h.b16 %v857
  %v946 = vunpack.c.l.b16 %v858
  %v947 = vunpack.c.h.b16 %v858
  %v948 = vunpack.c.l.b16 %v859
  %v949 = vunpack.c.h.b16 %v859
  %v950 = vunpack.c.l.b16 %v860
  %v951 = vunpack.c.h.b16 %v860
  %v952 = vunpack.c.l.b16 %v861
  %v953 = vunpack.c.h.b16 %v861
  %v954 = vunpack.c.l.b16 %v862
  %v955 = vunpack.c.h.b16 %v862
  %v956 = vunpack.c.l.b16 %v863
  %v957 = vunpack.c.h.b16 %v863
  %v958 = vunpack.c.l.b16 %v864
  %v959 = vunpack.c.h.b16 %v864
  %v960 = vunpack.c.l.b16 %v865
  %v961 = vunpack.c.h.b16 %v865
  %v962 = vunpack.c.l.b16 %v866
  %v963 = vunpack.c.h.b16 %v866
  %v964 = vunpack.c.l.b16 %v867
  %v965 = vunpack.c.h.b16 %v867
  %v966 = vunpack.c.l.b16 %v868
  %v967 = vunpack.c.h.b16 %v868
  %v968 = vunpack.c.l.b16 %v869
  %v969 = vunpack.c.h.b16 %v869
  %v970 = vunpack.c.l.b16 %v870
  %v971 = vunpack.c.h.b16 %v870
  %v972 = vunpack.c.l.b16 %v871
  %v973 = vunpack.c.h.b16 %v871
  %v974 = vunpack.c.l.b16 %v872
  %v975 = vunpack.c.h.b16 %v872
  %v976 = vunpack.c.l.b16 %v873
  %v977 = vunpack.c.h.b16 %v873
  %v978 = vunpack.c.l.b16 %v874
  %v979 = vunpack.c.h.b16 %v874
  %v980 = vunpack.c.l.b16 %v875
  %v981 = vunpack.c.h.b16 %v875
  %v982 = vunpack.c.l.b16 %v876
  %v983 = vunpack.c.h.b16 %v876
  %v984 = vunpack.c.l.b16 %v877
  %v985 = vunpack.c.h.b16 %v877
  %v986 = vpack.c.b16 %v924, %v922
  %v987 = vpack.c.b16 %v925, %v923
  %v988 = vpack.c.b16 %v928, %v926
  %v989 = vpack.c.b16 %v929, %v927
  %v990 = vpack.c.b16 %v932, %v930
  %v991 = vpack.c.b16 %v933, %v931
  %v992 = vpack.c.b16 %v936, %v934
  %v993 = vpack.c.b16 %v937, %v935
  %v994 = vpack.c.b16 %v940, %v938
  %v995 = vpack.c.b16 %v941, %v939
  %v996 = vpack.c.b16 %v944, %v942
  %v997 = vpack.c.b16 %v945, %v943
  %v998 = vpack.c.b16 %v948, %v946
  %v999 = vpack.c.b16 %v949, %v947
  %v1000 = vpack.c.b16 %v952, %v950
  %v1001 = vpack.c.b16 %v953, %v951
  %v1002 = vpack.c.b16 %v956, %v954
  %v1003 = vpack.c.b16 %v957, %v955
  %v1004 = vpack.c.b16 %v960, %v958
  %v1005 = vpack.c.b16 %v961, %v959
  %v1006 = vpack.c.b16 %v964, %v962
  %v1007 = vpack.c.b16 %v965, %v963
  %v1008 = vpack.c.b16 %v968, %v966
  %v1009 = vpack.c.b16 %v969, %v967
  %v1010 = vpack.c.b16 %v972, %v970
  %v1011 = vpack.c.b16 %v973, %v971
  %v1012 = vpack.c.b16 %v976, %v974
  %v1013 = vpack.c.b16 %v977, %v975
  %v1014 = vpack.c.b16 %v980, %v978
  %v1015 = vpack.c.b16 %v981, %v979
  %v1016 = vpack.c.b16 %v984, %v982
  %v1017 = vpack.c.b16 %v985, %v983
  %1050 = vmatprep.subr.bf16.mxu0 %v1001
  %1051 = vmatpush1.bf16.msra.mxu0 %v1000
  %1052 = vmatprep.subr.bf16.mxu0 %v999
  %1053 = vmatpush1.bf16.msra.mxu0 %v998
  %1054 = vmatprep.subr.bf16.mxu0 %v997
  %1055 = vmatpush1.bf16.msra.mxu0 %v996
  %1056 = vmatprep.subr.bf16.mxu0 %v995
  %1057 = vmatpush1.bf16.msra.mxu0 %v994
  %1058 = vmatprep.subr.bf16.mxu0 %v993
  %1059 = vmatpush1.bf16.msra.mxu0 %v992
  %1060 = vmatprep.subr.bf16.mxu0 %v991
  %1061 = vmatpush1.bf16.msra.mxu0 %v990
  %1062 = vmatprep.subr.bf16.mxu0 %v989
  %1063 = vmatpush1.bf16.msra.mxu0 %v988
  %1064 = vmatprep.subr.bf16.mxu0 %v987
  %1065 = vmatpush1.bf16.msra.mxu0 %v986
  %1066 = vmatprep.subr.bf16.mxu0 %v1017
  %1067 = vmatpush2.bf16.msra.mxu0 %v1016
  %1068 = vmatprep.subr.bf16.mxu0 %v1015
  %1069 = vmatpush2.bf16.msra.mxu0 %v1014
  %1070 = vmatprep.subr.bf16.mxu0 %v1013
  %1071 = vmatpush2.bf16.msra.mxu0 %v1012
  %1072 = vmatprep.subr.bf16.mxu0 %v1011
  %1073 = vmatpush2.bf16.msra.mxu0 %v1010
  %1074 = vmatprep.subr.bf16.mxu0 %v1009
  %1075 = vmatpush2.bf16.msra.mxu0 %v1008
  %1076 = vmatprep.subr.bf16.mxu0 %v1007
  %1077 = vmatpush2.bf16.msra.mxu0 %v1006
  %1078 = vmatprep.subr.bf16.mxu0 %v1005
  %1079 = vmatpush2.bf16.msra.mxu0 %v1004
  %1080 = vmatprep.subr.bf16.mxu0 %v1003
  %1081 = vmatpush2.bf16.msra.mxu0 %v1002
  %1082 = vmatprep.mubr.bf16.mxu0 %v703
  %1083 = vmatmul.mubr.bf16.gmra.mxu0 %v702
  %v1084 = vpop.f32.mrf.mxu0
  %v1085 = vadd.f32 %v883, %v1084
  %v1086 = vpop.f32.mrf.mxu0
  %v1087 = vadd.f32 %v887, %v1086
  %v1088 = vpop.f32.mrf.mxu0
  %v1089 = vadd.f32 %v883, %v1088
  %v1090 = vpop.f32.mrf.mxu0
  %v1091 = vadd.f32 %v887, %v1090
  %1092 = vmatprep.mubr.bf16.mxu0 %v705
  %1093 = vmatmul.mubr.bf16.gmra.mxu0 %v704
  %v1094 = vpop.f32.mrf.mxu0
  %v1095 = vadd.f32 %v883, %v1094
  %v1096 = vpop.f32.mrf.mxu0
  %v1097 = vadd.f32 %v887, %v1096
  %v1098 = vpop.f32.mrf.mxu0
  %v1099 = vadd.f32 %v883, %v1098
  %v1100 = vpop.f32.mrf.mxu0
  %v1101 = vadd.f32 %v887, %v1100
  %1102 = vmatprep.mubr.bf16.mxu0 %v707
  %1103 = vmatmul.mubr.bf16.gmra.mxu0 %v706
  %v1104 = vpop.f32.mrf.mxu0
  %v1105 = vadd.f32 %v883, %v1104
  %v1106 = vpop.f32.mrf.mxu0
  %v1107 = vadd.f32 %v887, %v1106
  %v1108 = vpop.f32.mrf.mxu0
  %v1109 = vadd.f32 %v883, %v1108
  %v1110 = vpop.f32.mrf.mxu0
  %v1111 = vadd.f32 %v887, %v1110
  %1112 = vmatprep.mubr.bf16.mxu0 %v709
  %1113 = vmatmul.mubr.bf16.gmra.mxu0 %v708
  %v1114 = vpop.f32.mrf.mxu0
  %v1115 = vadd.f32 %v883, %v1114
  %v1116 = vpop.f32.mrf.mxu0
  %v1117 = vadd.f32 %v887, %v1116
  %v1118 = vpop.f32.mrf.mxu0
  %v1119 = vadd.f32 %v883, %v1118
  %v1120 = vpop.f32.mrf.mxu0
  %v1121 = vadd.f32 %v887, %v1120
  %1122 = vmatprep.mubr.bf16.mxu0 %v711
  %1123 = vmatmul.mubr.bf16.gmra.mxu0 %v710
  %v1124 = vpop.f32.mrf.mxu0
  %v1125 = vadd.f32 %v883, %v1124
  %v1126 = vpop.f32.mrf.mxu0
  %v1127 = vadd.f32 %v887, %v1126
  %v1128 = vpop.f32.mrf.mxu0
  %v1129 = vadd.f32 %v883, %v1128
  %v1130 = vpop.f32.mrf.mxu0
  %v1131 = vadd.f32 %v887, %v1130
  %1132 = vmatprep.mubr.bf16.mxu0 %v713
  %1133 = vmatmul.mubr.bf16.gmra.mxu0 %v712
  %v1134 = vpop.f32.mrf.mxu0
  %v1135 = vadd.f32 %v883, %v1134
  %v1136 = vpop.f32.mrf.mxu0
  %v1137 = vadd.f32 %v887, %v1136
  %v1138 = vpop.f32.mrf.mxu0
  %v1139 = vadd.f32 %v883, %v1138
  %v1140 = vpop.f32.mrf.mxu0
  %v1141 = vadd.f32 %v887, %v1140
  %1142 = vmatprep.mubr.bf16.mxu0 %v715
  %1143 = vmatmul.mubr.bf16.gmra.mxu0 %v714
  %v1144 = vpop.f32.mrf.mxu0
  %v1145 = vadd.f32 %v883, %v1144
  %v1146 = vpop.f32.mrf.mxu0
  %v1147 = vadd.f32 %v887, %v1146
  %v1148 = vpop.f32.mrf.mxu0
  %v1149 = vadd.f32 %v883, %v1148
  %v1150 = vpop.f32.mrf.mxu0
  %v1151 = vadd.f32 %v887, %v1150
  %1152 = vmatprep.mubr.bf16.mxu0 %v717
  %1153 = vmatmul.mubr.bf16.gmra.mxu0 %v716
  %v1154 = vpop.f32.mrf.mxu0
  %v1155 = vadd.f32 %v883, %v1154
  %v1156 = vpop.f32.mrf.mxu0
  %v1157 = vadd.f32 %v887, %v1156
  %v1158 = vpop.f32.mrf.mxu0
  %v1159 = vadd.f32 %v883, %v1158
  %v1160 = vpop.f32.mrf.mxu0
  %v1161 = vadd.f32 %v887, %v1160
  %1162 = vdwg.mxu0
  %v1163 = vmax.f32 %v1085, 0.0
  %v1164 = vmax.f32 %v1087, 0.0
  %v1165 = vmax.f32 %v1089, 0.0
  %v1166 = vmax.f32 %v1091, 0.0
  %v1167 = vmax.f32 %v1095, 0.0
  %v1168 = vmax.f32 %v1097, 0.0
  %v1169 = vmax.f32 %v1099, 0.0
  %v1170 = vmax.f32 %v1101, 0.0
  %v1171 = vmax.f32 %v1105, 0.0
  %v1172 = vmax.f32 %v1107, 0.0
  %v1173 = vmax.f32 %v1109, 0.0
  %v1174 = vmax.f32 %v1111, 0.0
  %v1175 = vmax.f32 %v1115, 0.0
  %v1176 = vmax.f32 %v1117, 0.0
  %v1177 = vmax.f32 %v1119, 0.0
  %v1178 = vmax.f32 %v1121, 0.0
  %v1179 = vmax.f32 %v1125, 0.0
  %v1180 = vmax.f32 %v1127, 0.0
  %v1181 = vmax.f32 %v1129, 0.0
  %v1182 = vmax.f32 %v1131, 0.0
  %v1183 = vmax.f32 %v1135, 0.0
  %v1184 = vmax.f32 %v1137, 0.0
  %v1185 = vmax.f32 %v1139, 0.0
  %v1186 = vmax.f32 %v1141, 0.0
  %v1187 = vmax.f32 %v1145, 0.0
  %v1188 = vmax.f32 %v1147, 0.0
  %v1189 = vmax.f32 %v1149, 0.0
  %v1190 = vmax.f32 %v1151, 0.0
  %v1191 = vmax.f32 %v1155, 0.0
  %v1192 = vmax.f32 %v1157, 0.0
  %v1193 = vmax.f32 %v1159, 0.0
  %v1194 = vmax.f32 %v1161, 0.0
  %v1195 = vpack.c.bf16 %v1165, %v1163
  %v1196 = vpack.c.bf16 %v1166, %v1164
  %v1197 = vpack.c.bf16 %v1169, %v1167
  %v1198 = vpack.c.bf16 %v1170, %v1168
  %v1199 = vpack.c.bf16 %v1173, %v1171
  %v1200 = vpack.c.bf16 %v1174, %v1172
  %v1201 = vpack.c.bf16 %v1177, %v1175
  %v1202 = vpack.c.bf16 %v1178, %v1176
  %v1203 = vpack.c.bf16 %v1181, %v1179
  %v1204 = vpack.c.bf16 %v1182, %v1180
  %v1205 = vpack.c.bf16 %v1185, %v1183
  %v1206 = vpack.c.bf16 %v1186, %v1184
  %v1207 = vpack.c.bf16 %v1189, %v1187
  %v1208 = vpack.c.bf16 %v1190, %v1188
  %v1209 = vpack.c.bf16 %v1193, %v1191
  %v1210 = vpack.c.bf16 %v1194, %v1192
  %v1211 = vld [vmem:[%s5] sm:$0xf]
  %v1212 = vld [vmem:[%s5 + $0x4] sm:$0xf]
  %v1213 = vld [vmem:[%s5 + $0x8] sm:$0xf]
  %v1214 = vld [vmem:[%s5 + $0xc] sm:$0xf]
  %v1215 = vld [vmem:[%s5 + $0x10] sm:$0xf]
  %v1216 = vld [vmem:[%s5 + $0x14] sm:$0xf]
  %v1217 = vld [vmem:[%s5 + $0x18] sm:$0xf]
  %v1218 = vld [vmem:[%s5 + $0x1c] sm:$0xf]
  %v1219 = vld [vmem:[%s5 + $0x20] sm:$0xf]
  %v1220 = vld [vmem:[%s5 + $0x24] sm:$0xf]
  %v1221 = vld [vmem:[%s5 + $0x28] sm:$0xf]
  %v1222 = vld [vmem:[%s5 + $0x2c] sm:$0xf]
  %v1223 = vld [vmem:[%s5 + $0x30] sm:$0xf]
  %v1224 = vld [vmem:[%s5 + $0x34] sm:$0xf]
  %v1225 = vld [vmem:[%s5 + $0x38] sm:$0xf]
  %v1226 = vld [vmem:[%s5 + $0x3c] sm:$0xf]
  %v1227 = vld [vmem:[%s5 + $0x40] sm:$0xf]
  %v1228 = vld [vmem:[%s5 + $0x44] sm:$0xf]
  %v1229 = vld [vmem:[%s5 + $0x48] sm:$0xf]
  %v1230 = vld [vmem:[%s5 + $0x4c] sm:$0xf]
  %v1231 = vld [vmem:[%s5 + $0x50] sm:$0xf]
  %v1232 = vld [vmem:[%s5 + $0x54] sm:$0xf]
  %v1233 = vld [vmem:[%s5 + $0x58] sm:$0xf]
  %v1234 = vld [vmem:[%s5 + $0x5c] sm:$0xf]
  %v1235 = vld [vmem:[%s5 + $0x60] sm:$0xf]
  %v1236 = vld [vmem:[%s5 + $0x64] sm:$0xf]
  %v1237 = vld [vmem:[%s5 + $0x68] sm:$0xf]
  %v1238 = vld [vmem:[%s5 + $0x6c] sm:$0xf]
  %v1239 = vld [vmem:[%s5 + $0x70] sm:$0xf]
  %v1240 = vld [vmem:[%s5 + $0x74] sm:$0xf]
  %v1241 = vld [vmem:[%s5 + $0x78] sm:$0xf]
  %v1242 = vld [vmem:[%s5 + $0x7c] sm:$0xf]
  %v1243 = vld [vmem:[%s6] sm:$0x1]
  %v1245 = vlaneseq
  %v1246 = vshrl.u32 %v1245, 7
  %v1247 = vsub.s32 0, %v1246
  %v1248 = vrot.slane %v1243, %v1247
  %v1282 = vunpack.c.l.b16 %v1211
  %v1283 = vunpack.c.l.b16 %v1212
  %v1284 = vunpack.c.l.b16 %v1213
  %v1285 = vunpack.c.l.b16 %v1214
  %v1286 = vunpack.c.l.b16 %v1215
  %v1287 = vunpack.c.l.b16 %v1216
  %v1288 = vunpack.c.l.b16 %v1217
  %v1289 = vunpack.c.l.b16 %v1218
  %v1290 = vunpack.c.l.b16 %v1219
  %v1291 = vunpack.c.l.b16 %v1220
  %v1292 = vunpack.c.l.b16 %v1221
  %v1293 = vunpack.c.l.b16 %v1222
  %v1294 = vunpack.c.l.b16 %v1223
  %v1295 = vunpack.c.l.b16 %v1224
  %v1296 = vunpack.c.l.b16 %v1225
  %v1297 = vunpack.c.l.b16 %v1226
  %v1298 = vunpack.c.l.b16 %v1227
  %v1299 = vunpack.c.l.b16 %v1228
  %v1300 = vunpack.c.l.b16 %v1229
  %v1301 = vunpack.c.l.b16 %v1230
  %v1302 = vunpack.c.l.b16 %v1231
  %v1303 = vunpack.c.l.b16 %v1232
  %v1304 = vunpack.c.l.b16 %v1233
  %v1305 = vunpack.c.l.b16 %v1234
  %v1306 = vunpack.c.l.b16 %v1235
  %v1307 = vunpack.c.l.b16 %v1236
  %v1308 = vunpack.c.l.b16 %v1237
  %v1309 = vunpack.c.l.b16 %v1238
  %v1310 = vunpack.c.l.b16 %v1239
  %v1311 = vunpack.c.l.b16 %v1240
  %v1312 = vunpack.c.l.b16 %v1241
  %v1313 = vunpack.c.l.b16 %v1242
  %v1314 = vpack.c.b16 %v1283, %v1282
  %v1315 = vpack.c.b16 %v1285, %v1284
  %v1316 = vpack.c.b16 %v1287, %v1286
  %v1317 = vpack.c.b16 %v1289, %v1288
  %v1318 = vpack.c.b16 %v1291, %v1290
  %v1319 = vpack.c.b16 %v1293, %v1292
  %v1320 = vpack.c.b16 %v1295, %v1294
  %v1321 = vpack.c.b16 %v1297, %v1296
  %v1322 = vpack.c.b16 %v1299, %v1298
  %v1323 = vpack.c.b16 %v1301, %v1300
  %v1324 = vpack.c.b16 %v1303, %v1302
  %v1325 = vpack.c.b16 %v1305, %v1304
  %v1326 = vpack.c.b16 %v1307, %v1306
  %v1327 = vpack.c.b16 %v1309, %v1308
  %v1328 = vpack.c.b16 %v1311, %v1310
  %v1329 = vpack.c.b16 %v1313, %v1312
  %1346 = vmatprep.subr.bf16.mxu0 0
  %1347 = vmatpush1.bf16.msra.mxu0 %v1321
  %1348 = vmatprep.subr.bf16.mxu0 0
  %1349 = vmatpush1.bf16.msra.mxu0 %v1320
  %1350 = vmatprep.subr.bf16.mxu0 0
  %1351 = vmatpush1.bf16.msra.mxu0 %v1319
  %1352 = vmatprep.subr.bf16.mxu0 0
  %1353 = vmatpush1.bf16.msra.mxu0 %v1318
  %1354 = vmatprep.subr.bf16.mxu0 0
  %1355 = vmatpush1.bf16.msra.mxu0 %v1317
  %1356 = vmatprep.subr.bf16.mxu0 0
  %1357 = vmatpush1.bf16.msra.mxu0 %v1316
  %1358 = vmatprep.subr.bf16.mxu0 0
  %1359 = vmatpush1.bf16.msra.mxu0 %v1315
  %1360 = vmatprep.subr.bf16.mxu0 0
  %1361 = vmatpush1.bf16.msra.mxu0 %v1314
  %1362 = vmatprep.subr.bf16.mxu0 0
  %1363 = vmatpush2.bf16.msra.mxu0 %v1329
  %1364 = vmatprep.subr.bf16.mxu0 0
  %1365 = vmatpush2.bf16.msra.mxu0 %v1328
  %1366 = vmatprep.subr.bf16.mxu0 0
  %1367 = vmatpush2.bf16.msra.mxu0 %v1327
  %1368 = vmatprep.subr.bf16.mxu0 0
  %1369 = vmatpush2.bf16.msra.mxu0 %v1326
  %1370 = vmatprep.subr.bf16.mxu0 0
  %1371 = vmatpush2.bf16.msra.mxu0 %v1325
  %1372 = vmatprep.subr.bf16.mxu0 0
  %1373 = vmatpush2.bf16.msra.mxu0 %v1324
  %1374 = vmatprep.subr.bf16.mxu0 0
  %1375 = vmatpush2.bf16.msra.mxu0 %v1323
  %1376 = vmatprep.subr.bf16.mxu0 0
  %1377 = vmatpush2.bf16.msra.mxu0 %v1322
  %1378 = vmatprep.mubr.bf16.mxu0 %v1196
  %1379 = vmatmul.mubr.bf16.gmra.mxu0 %v1195
  %v1380 = vpop.f32.mrf.mxu0
  %v1381 = vadd.f32 %v1248, %v1380
  %v1382 = vpop.f32.mrf.mxu0
  %v1383 = vpop.f32.mrf.mxu0
  %v1384 = vadd.f32 %v1248, %v1383
  %v1385 = vpop.f32.mrf.mxu0
  %1386 = vmatprep.mubr.bf16.mxu0 %v1198
  %1387 = vmatmul.mubr.bf16.gmra.mxu0 %v1197
  %v1388 = vpop.f32.mrf.mxu0
  %v1389 = vadd.f32 %v1248, %v1388
  %v1390 = vpop.f32.mrf.mxu0
  %v1391 = vpop.f32.mrf.mxu0
  %v1392 = vadd.f32 %v1248, %v1391
  %v1393 = vpop.f32.mrf.mxu0
  %1394 = vmatprep.mubr.bf16.mxu0 %v1200
  %1395 = vmatmul.mubr.bf16.gmra.mxu0 %v1199
  %v1396 = vpop.f32.mrf.mxu0
  %v1397 = vadd.f32 %v1248, %v1396
  %v1398 = vpop.f32.mrf.mxu0
  %v1399 = vpop.f32.mrf.mxu0
  %v1400 = vadd.f32 %v1248, %v1399
  %v1401 = vpop.f32.mrf.mxu0
  %1402 = vmatprep.mubr.bf16.mxu0 %v1202
  %1403 = vmatmul.mubr.bf16.gmra.mxu0 %v1201
  %v1404 = vpop.f32.mrf.mxu0
  %v1405 = vadd.f32 %v1248, %v1404
  %v1406 = vpop.f32.mrf.mxu0
  %v1407 = vpop.f32.mrf.mxu0
  %v1408 = vadd.f32 %v1248, %v1407
  %v1409 = vpop.f32.mrf.mxu0
  %1410 = vmatprep.mubr.bf16.mxu0 %v1204
  %1411 = vmatmul.mubr.bf16.gmra.mxu0 %v1203
  %v1412 = vpop.f32.mrf.mxu0
  %v1413 = vadd.f32 %v1248, %v1412
  %v1414 = vpop.f32.mrf.mxu0
  %v1415 = vpop.f32.mrf.mxu0
  %v1416 = vadd.f32 %v1248, %v1415
  %v1417 = vpop.f32.mrf.mxu0
  %1418 = vmatprep.mubr.bf16.mxu0 %v1206
  %1419 = vmatmul.mubr.bf16.gmra.mxu0 %v1205
  %v1420 = vpop.f32.mrf.mxu0
  %v1421 = vadd.f32 %v1248, %v1420
  %v1422 = vpop.f32.mrf.mxu0
  %v1423 = vpop.f32.mrf.mxu0
  %v1424 = vadd.f32 %v1248, %v1423
  %v1425 = vpop.f32.mrf.mxu0
  %1426 = vmatprep.mubr.bf16.mxu0 %v1208
  %1427 = vmatmul.mubr.bf16.gmra.mxu0 %v1207
  %v1428 = vpop.f32.mrf.mxu0
  %v1429 = vadd.f32 %v1248, %v1428
  %v1430 = vpop.f32.mrf.mxu0
  %v1431 = vpop.f32.mrf.mxu0
  %v1432 = vadd.f32 %v1248, %v1431
  %v1433 = vpop.f32.mrf.mxu0
  %1434 = vmatprep.mubr.bf16.mxu0 %v1210
  %1435 = vmatmul.mubr.bf16.gmra.mxu0 %v1209
  %v1436 = vpop.f32.mrf.mxu0
  %v1437 = vadd.f32 %v1248, %v1436
  %v1438 = vpop.f32.mrf.mxu0
  %v1439 = vpop.f32.mrf.mxu0
  %v1440 = vadd.f32 %v1248, %v1439
  %v1441 = vpop.f32.mrf.mxu0
  %1442 = vdwg.mxu0
  %v1443 = vxor.u32 %v1381, 2147483648
  %v1444 = vxor.u32 %v1384, 2147483648
  %v1445 = vxor.u32 %v1389, 2147483648
  %v1446 = vxor.u32 %v1392, 2147483648
  %v1447 = vxor.u32 %v1397, 2147483648
  %v1448 = vxor.u32 %v1400, 2147483648
  %v1449 = vxor.u32 %v1405, 2147483648
  %v1450 = vxor.u32 %v1408, 2147483648
  %v1451 = vxor.u32 %v1413, 2147483648
  %v1452 = vxor.u32 %v1416, 2147483648
  %v1453 = vxor.u32 %v1421, 2147483648
  %v1454 = vxor.u32 %v1424, 2147483648
  %v1455 = vxor.u32 %v1429, 2147483648
  %v1456 = vxor.u32 %v1432, 2147483648
  %v1457 = vxor.u32 %v1437, 2147483648
  %v1458 = vxor.u32 %v1440, 2147483648
  %v1459 = vmul.f32 %v1443, 1.442695
  %v1460 = vpow.pop %v1459
  %v1461 = vmul.f32 %v1444, 1.442695
  %v1462 = vpow.pop %v1461
  %v1463 = vmul.f32 %v1445, 1.442695
  %v1464 = vpow.pop %v1463
  %v1465 = vmul.f32 %v1446, 1.442695
  %v1466 = vpow.pop %v1465
  %v1467 = vmul.f32 %v1447, 1.442695
  %v1468 = vpow.pop %v1467
  %v1469 = vmul.f32 %v1448, 1.442695
  %v1470 = vpow.pop %v1469
  %v1471 = vmul.f32 %v1449, 1.442695
  %v1472 = vpow.pop %v1471
  %v1473 = vmul.f32 %v1450, 1.442695
  %v1474 = vpow.pop %v1473
  %v1475 = vmul.f32 %v1451, 1.442695
  %v1476 = vpow.pop %v1475
  %v1477 = vmul.f32 %v1452, 1.442695
  %v1478 = vpow.pop %v1477
  %v1479 = vmul.f32 %v1453, 1.442695
  %v1480 = vpow.pop %v1479
  %v1481 = vmul.f32 %v1454, 1.442695
  %v1482 = vpow.pop %v1481
  %v1483 = vmul.f32 %v1455, 1.442695
  %v1484 = vpow.pop %v1483
  %v1485 = vmul.f32 %v1456, 1.442695
  %v1486 = vpow.pop %v1485
  %v1487 = vmul.f32 %v1457, 1.442695
  %v1488 = vpow.pop %v1487
  %v1489 = vmul.f32 %v1458, 1.442695
  %v1490 = vpow.pop %v1489
  %v1491 = vadd.f32 %v1460, 1.0
  %v1492 = vadd.f32 %v1462, 1.0
  %v1493 = vadd.f32 %v1464, 1.0
  %v1494 = vadd.f32 %v1466, 1.0
  %v1495 = vadd.f32 %v1468, 1.0
  %v1496 = vadd.f32 %v1470, 1.0
  %v1497 = vadd.f32 %v1472, 1.0
  %v1498 = vadd.f32 %v1474, 1.0
  %v1499 = vadd.f32 %v1476, 1.0
  %v1500 = vadd.f32 %v1478, 1.0
  %v1501 = vadd.f32 %v1480, 1.0
  %v1502 = vadd.f32 %v1482, 1.0
  %v1503 = vadd.f32 %v1484, 1.0
  %v1504 = vadd.f32 %v1486, 1.0
  %v1505 = vadd.f32 %v1488, 1.0
  %v1506 = vadd.f32 %v1490, 1.0
  %v1507 = vrcp.pop %v1491
  %v1508 = vmul.f32 1.0, %v1507
  %v1509 = vrcp.pop %v1492
  %v1510 = vmul.f32 1.0, %v1509
  %v1511 = vrcp.pop %v1493
  %v1512 = vmul.f32 1.0, %v1511
  %v1513 = vrcp.pop %v1494
  %v1514 = vmul.f32 1.0, %v1513
  %v1515 = vrcp.pop %v1495
  %v1516 = vmul.f32 1.0, %v1515
  %v1517 = vrcp.pop %v1496
  %v1518 = vmul.f32 1.0, %v1517
  %v1519 = vrcp.pop %v1497
  %v1520 = vmul.f32 1.0, %v1519
  %v1521 = vrcp.pop %v1498
  %v1522 = vmul.f32 1.0, %v1521
  %v1523 = vrcp.pop %v1499
  %v1524 = vmul.f32 1.0, %v1523
  %v1525 = vrcp.pop %v1500
  %v1526 = vmul.f32 1.0, %v1525
  %v1527 = vrcp.pop %v1501
  %v1528 = vmul.f32 1.0, %v1527
  %v1529 = vrcp.pop %v1502
  %v1530 = vmul.f32 1.0, %v1529
  %v1531 = vrcp.pop %v1503
  %v1532 = vmul.f32 1.0, %v1531
  %v1533 = vrcp.pop %v1504
  %v1534 = vmul.f32 1.0, %v1533
  %v1535 = vrcp.pop %v1505
  %v1536 = vmul.f32 1.0, %v1535
  %v1537 = vrcp.pop %v1506
  %v1538 = vmul.f32 1.0, %v1537
  %v1539 = vlaneseq
  %v1540 = vand.u32 %v1539, 127
  %vm1541 = vcmp.eq.s32.totalorder %v1540, 0
  %v1542 = vld [vmem:[%s7] sm:$0xf]
  %v1543 = vld [vmem:[%s7 + $0x4] sm:$0xf]
  %v1544 = vld [vmem:[%s7 + $0x8] sm:$0xf]
  %v1545 = vld [vmem:[%s7 + $0xc] sm:$0xf]
  %v1546 = vld [vmem:[%s7 + $0x10] sm:$0xf]
  %v1547 = vld [vmem:[%s7 + $0x14] sm:$0xf]
  %v1548 = vld [vmem:[%s7 + $0x18] sm:$0xf]
  %v1549 = vld [vmem:[%s7 + $0x1c] sm:$0xf]
  %v1550 = vld [vmem:[%s7 + $0x20] sm:$0xf]
  %v1551 = vld [vmem:[%s7 + $0x24] sm:$0xf]
  %v1552 = vld [vmem:[%s7 + $0x28] sm:$0xf]
  %v1553 = vld [vmem:[%s7 + $0x2c] sm:$0xf]
  %v1554 = vld [vmem:[%s7 + $0x30] sm:$0xf]
  %v1555 = vld [vmem:[%s7 + $0x34] sm:$0xf]
  %v1556 = vld [vmem:[%s7 + $0x38] sm:$0xf]
  %v1557 = vld [vmem:[%s7 + $0x3c] sm:$0xf]
  %v1558 = vpack.c.bf16 %v1510, %v1508
  %v1559 = vpack.c.bf16 %v1514, %v1512
  %v1560 = vpack.c.bf16 %v1518, %v1516
  %v1561 = vpack.c.bf16 %v1522, %v1520
  %v1562 = vpack.c.bf16 %v1526, %v1524
  %v1563 = vpack.c.bf16 %v1530, %v1528
  %v1564 = vpack.c.bf16 %v1534, %v1532
  %v1565 = vpack.c.bf16 %v1538, %v1536
  %vm1566 = vmpackc.low %vm1541, %vm1541
  %v1575 = vunpack.c.l.b16 %v1558
  %v1576 = vunpack.c.h.b16 %v1558
  %v1577 = vunpack.c.l.b16 %v1559
  %v1578 = vunpack.c.h.b16 %v1559
  %v1579 = vunpack.c.l.b16 %v1560
  %v1580 = vunpack.c.h.b16 %v1560
  %v1581 = vunpack.c.l.b16 %v1561
  %v1582 = vunpack.c.h.b16 %v1561
  %v1583 = vunpack.c.l.b16 %v1562
  %v1584 = vunpack.c.h.b16 %v1562
  %v1585 = vunpack.c.l.b16 %v1563
  %v1586 = vunpack.c.h.b16 %v1563
  %v1587 = vunpack.c.l.b16 %v1564
  %v1588 = vunpack.c.h.b16 %v1564
  %v1589 = vunpack.c.l.b16 %v1565
  %v1590 = vunpack.c.h.b16 %v1565
  %v1591 = vpack.c.b16 %v1575, %v1575
  %v1592 = vpack.c.b16 %v1576, %v1576
  %v1593 = vpack.c.b16 %v1577, %v1577
  %v1594 = vpack.c.b16 %v1578, %v1578
  %v1595 = vpack.c.b16 %v1579, %v1579
  %v1596 = vpack.c.b16 %v1580, %v1580
  %v1597 = vpack.c.b16 %v1581, %v1581
  %v1598 = vpack.c.b16 %v1582, %v1582
  %v1599 = vpack.c.b16 %v1583, %v1583
  %v1600 = vpack.c.b16 %v1584, %v1584
  %v1601 = vpack.c.b16 %v1585, %v1585
  %v1602 = vpack.c.b16 %v1586, %v1586
  %v1603 = vpack.c.b16 %v1587, %v1587
  %v1604 = vpack.c.b16 %v1588, %v1588
  %v1605 = vpack.c.b16 %v1589, %v1589
  %v1606 = vpack.c.b16 %v1590, %v1590
  %v1623 = vsel %vm1566, %v1542, %v1591
  %v1624 = vsel %vm1566, %v1543, %v1592
  %v1625 = vsel %vm1566, %v1544, %v1593
  %v1626 = vsel %vm1566, %v1545, %v1594
  %v1627 = vsel %vm1566, %v1546, %v1595
  %v1628 = vsel %vm1566, %v1547, %v1596
  %v1629 = vsel %vm1566, %v1548, %v1597
  %v1630 = vsel %vm1566, %v1549, %v1598
  %v1631 = vsel %vm1566, %v1550, %v1599
  %v1632 = vsel %vm1566, %v1551, %v1600
  %v1633 = vsel %vm1566, %v1552, %v1601
  %v1634 = vsel %vm1566, %v1553, %v1602
  %v1635 = vsel %vm1566, %v1554, %v1603
  %v1636 = vsel %vm1566, %v1555, %v1604
  %v1637 = vsel %vm1566, %v1556, %v1605
  %v1638 = vsel %vm1566, %v1557, %v1606
  %1639 = vst [vmem:[%s7] sm:$0xf] %v1623
  %1640 = vst [vmem:[%s7 + $0x4] sm:$0xf] %v1624
  %1641 = vst [vmem:[%s7 + $0x8] sm:$0xf] %v1625
  %1642 = vst [vmem:[%s7 + $0xc] sm:$0xf] %v1626
  %1643 = vst [vmem:[%s7 + $0x10] sm:$0xf] %v1627
  %1644 = vst [vmem:[%s7 + $0x14] sm:$0xf] %v1628
  %1645 = vst [vmem:[%s7 + $0x18] sm:$0xf] %v1629
  %1646 = vst [vmem:[%s7 + $0x1c] sm:$0xf] %v1630
  %1647 = vst [vmem:[%s7 + $0x20] sm:$0xf] %v1631
  %1648 = vst [vmem:[%s7 + $0x24] sm:$0xf] %v1632
  %1649 = vst [vmem:[%s7 + $0x28] sm:$0xf] %v1633
  %1650 = vst [vmem:[%s7 + $0x2c] sm:$0xf] %v1634
  %1651 = vst [vmem:[%s7 + $0x30] sm:$0xf] %v1635
  %1652 = vst [vmem:[%s7 + $0x34] sm:$0xf] %v1636
  %1653 = vst [vmem:[%s7 + $0x38] sm:$0xf] %v1637
  %1654 = vst [vmem:[%s7 + $0x3c] sm:$0xf] %v1638
  // Predicated region
  $region30: #{geco_forward.1} parent=0 // pred_check
    _
  $region31: #{geco_forward.1} parent=0 // pred_check_branch
    %1656 = sbr.rel (0) target = $region33
  $region32: #{geco_forward.1} parent=0 // pred_region
    _
  $region33: #{geco_forward.1} parent=0 // pred_fallthru
    _
  // Predicated region
  $region34: #{geco_forward.1} parent=0 // pred_check
    _
  $region35: #{geco_forward.1} parent=0 // pred_check_branch
    %1658 = sbr.rel (0) target = $region37
  $region36: #{geco_forward.1} parent=0 // pred_region
    _
  $region37: #{geco_forward.1} parent=0 // pred_fallthru
    _

</llo_original>
